<compile_context>
chip_gen: v6e
topology: v6e:2x2x1
jax: 0.10.0
libtpu: 0.0.40
codegen_flags: <defaults>
</compile_context>

<pallas_src>
import functools

import numpy as np
import jax
import jax.numpy as jnp
from jax import lax
from jax.experimental import pallas as pl
from jax.experimental.pallas import tpu as pltpu


# ------------------------- Fused decoder kernel -----------------------------
def decoder_kernel(x_ref, wih_ref, whh_ref, b_ref, lw_ref, lb_ref, out_ref,
                   xproj_sc, *, batch_size):
    """
    x_ref   : (N, E)   bf16  time-major flattened inputs, N = (T+1)*B
    wih_ref : (E, 4H)  bf16  input->hidden weights ([i,f,g,o] blocks of H lanes)
    whh_ref : (H, 4H)  bf16  hidden->hidden weights
    b_ref   : (1, 4H)  f32   combined LSTM bias (b_ih + b_hh)
    lw_ref  : (H, V)   bf16  output projection
    lb_ref  : (1, V)   f32
    out_ref : (N, V)   f32   projection of every (t, b) hidden state
    xproj_sc: (N, 4H)  f32   scratch: hoisted input projection
    """
    b_sz = batch_size
    hid = whh_ref.shape[0]
    n_steps = x_ref.shape[0] // b_sz

    # ---- hoisted input projection: one big bf16 matmul for all timesteps ----
    xproj_sc[...] = (jnp.dot(x_ref[...], wih_ref[...],
                             preferred_element_type=jnp.float32)
                     + b_ref[...])

    # Hoist small weight loads out of the (unrolled) recurrence.
    whh = whh_ref[...]
    lw = lw_ref[...]
    lb = lb_ref[...]

    def step(t, carry):
        h_prev, c_prev = carry
        row = pl.multiple_of(t * b_sz, b_sz)

        # Serial-path matmul: (B, H) x (H, 4H) in bf16, f32 accumulation.
        gates = (xproj_sc[pl.ds(row, b_sz), :]
                 + jnp.dot(h_prev.astype(whh.dtype), whh,
                           preferred_element_type=jnp.float32))     # (B, 4H) f32

        # Whole-vreg activations (2 EUP passes), then per-gate lane slices.
        sig = jax.nn.sigmoid(gates)
        th = jnp.tanh(gates)
        i_g = sig[:, 0 * hid:1 * hid]
        f_g = sig[:, 1 * hid:2 * hid]
        g_g = th[:, 2 * hid:3 * hid]
        o_g = sig[:, 3 * hid:4 * hid]

        c_new = f_g * c_prev + i_g * g_g
        h_new = o_g * jnp.tanh(c_new)

        # Fused vocab projection for this timestep (no cross-step dependency,
        # fills MXU dead cycles of the unrolled recurrence). Lane-dense store.
        out_ref[pl.ds(row, b_sz), :] = (
            jnp.dot(h_new.astype(lw.dtype), lw,
                    preferred_element_type=jnp.float32) + lb
        ).astype(out_ref.dtype)

        return h_new, c_new

    h0 = jnp.zeros((b_sz, hid), jnp.float32)
    c0 = jnp.zeros((b_sz, hid), jnp.float32)
    # Small static trip count -> fully unroll for LLO scheduler visibility.
    lax.fori_loop(0, n_steps, step, (h0, c0), unroll=True)


def run_decoder(x_tm, params, batch_size):
    """x_tm: (N, E) bf16, time-major flattened. Returns (N, V) f32 logits."""
    N, E = x_tm.shape
    wih = params["w_ih"]      # (E, 4H) bf16
    whh = params["w_hh"]      # (H, 4H) bf16
    bias = params["lstm_b"]   # (1, 4H) f32
    lw = params["lin_w"]      # (H, V)  bf16
    lb = params["lin_b"]      # (1, V)  f32
    H, G4 = whh.shape
    V = lw.shape[1]

    kernel = functools.partial(decoder_kernel, batch_size=batch_size)

    return pl.pallas_call(
        kernel,
        out_shape=jax.ShapeDtypeStruct((N, V), jnp.float32),
        in_specs=[
            pl.BlockSpec((N, E), lambda: (0, 0)),
            pl.BlockSpec((E, G4), lambda: (0, 0)),
            pl.BlockSpec((H, G4), lambda: (0, 0)),
            pl.BlockSpec((1, G4), lambda: (0, 0)),
            pl.BlockSpec((H, V), lambda: (0, 0)),
            pl.BlockSpec((1, V), lambda: (0, 0)),
        ],
        out_specs=pl.BlockSpec((N, V), lambda: (0, 0)),
        scratch_shapes=[
            pltpu.VMEM((N, G4), jnp.float32),   # hoisted x @ W_ih + b
        ],
    )(x_tm, wih, whh, bias, lw, lb)


# ----------------------------- Decoder forward -------------------------------
def decoder_rasha_forward(params, features, captions, lengths):
    """
    features: (B, E) float32   encoded image features
    captions: (B, T) int32     token ids
    lengths : python list / np array of ints, each <= T+1
    Returns (sum(lengths), vocab_size) — same as the PyTorch packed-output linear.
    """
    B, T = captions.shape
    Tp1 = T + 1

    # Pad batch to a multiple of 8 so per-step rows stay sublane-aligned.
    B_pad = ((B + 7) // 8) * 8
    if B_pad != B:
        features = jnp.pad(features, ((0, B_pad - B), (0, 0)))
        captions = jnp.pad(captions, ((0, B_pad - B), (0, 0)))

    # Embedding lookup + feature concat (glue), then time-major flatten.
    emb = jnp.take(params["embed_w"], captions, axis=0)            # (Bp, T, E)
    seq = jnp.concatenate([features[:, None, :], emb], axis=1)      # (Bp, T+1, E)
    x_tm = jnp.transpose(seq, (1, 0, 2)).reshape(Tp1 * B_pad, -1)   # (Tp1*Bp, E)
    x_tm = x_tm.astype(jnp.bfloat16)                                # bf16 MXU operand

    # Fused LSTM + output projection over ALL (t, b) rows (static shape).
    out_all = run_decoder(x_tm, params, B_pad)                      # (Tp1*Bp, V)

    # pack_padded_sequence(enforce_sorted=False) row ordering, vectorized:
    # sort batch by length descending (stable), then time-major packing.
    lengths_np = np.asarray(lengths)
    order = np.argsort(-lengths_np, kind="stable")
    t_max = int(lengths_np.max())
    tt, bb = np.meshgrid(np.arange(t_max), order, indexing="ij")    # (t_max, B)
    valid = lengths_np[bb] > tt
    flat_idx = (tt[valid] * B_pad + bb[valid]).astype(np.int32)     # (sum(lengths),)

    # Dropout is identity in eval mode; projection already applied in-kernel.
    return out_all[jnp.asarray(flat_idx)]


# ----------------------------- Parameter init --------------------------------
def init_params(key, embed_size, hidden_size, vocab_size):
    H, E, V = hidden_size, embed_size, vocab_size

    ks = jax.random.split(key, 6)
    k_inv = 1.0 / np.sqrt(H)
    # nn.Embedding / nn.Linear init as in init_weights(); LSTM default init.
    embed_w = jax.random.uniform(ks[0], (V, E), minval=-0.1, maxval=0.1,
                                 dtype=jnp.float32)
    w_ih = jax.random.uniform(ks[1], (4 * H, E), minval=-k_inv, maxval=k_inv,
                              dtype=jnp.float32)
    w_hh = jax.random.uniform(ks[2], (4 * H, H), minval=-k_inv, maxval=k_inv,
                              dtype=jnp.float32)
    b_ih = jax.random.uniform(ks[3], (4 * H,), minval=-k_inv, maxval=k_inv,
                              dtype=jnp.float32)
    b_hh = jax.random.uniform(ks[4], (4 * H,), minval=-k_inv, maxval=k_inv,
                              dtype=jnp.float32)
    lin_w = jax.random.uniform(ks[5], (V, H), minval=-0.1, maxval=0.1,
                               dtype=jnp.float32)
    lin_b = jnp.zeros((V,), dtype=jnp.float32)

    # Compact, pre-transposed layouts (no gate padding), bf16 matmul weights.
    return {
        "embed_w": embed_w,                                          # (V, E) f32
        "w_ih": jnp.transpose(w_ih).astype(jnp.bfloat16),            # (E, 4H)
        "w_hh": jnp.transpose(w_hh).astype(jnp.bfloat16),            # (H, 4H)
        "lstm_b": (b_ih + b_hh)[None, :].astype(jnp.float32),        # (1, 4H)
        "lin_w": jnp.transpose(lin_w).astype(jnp.bfloat16),          # (H, V)
        "lin_b": lin_b[None, :],                                     # (1, V) f32
    }


# ----------------------------- Main -----------------------------------------
if __name__ == "__main__":
    B, T = 8, 8            # batch, caption length (sequence fed to LSTM is T+1)
    EMBED = 32
    HIDDEN = 32            # 4*H = 128 -> gates fill exactly one 128-lane block
    VOCAB = 256

    key = jax.random.PRNGKey(0)
    k_par, k_feat, k_cap = jax.random.split(key, 3)

    params = init_params(k_par, EMBED, HIDDEN, VOCAB)
    features = jax.random.normal(k_feat, (B, EMBED), dtype=jnp.float32)
    captions = jax.random.randint(k_cap, (B, T), 0, VOCAB, dtype=jnp.int32)
    lengths = [9, 8, 7, 7, 6, 5, 4, 3]   # each <= T+1

    out = decoder_rasha_forward(params, features, captions, lengths)
    out = jax.block_until_ready(out)

    expected_n = int(np.sum(lengths))
    assert out.shape == (expected_n, VOCAB), out.shape
    assert bool(jnp.all(jnp.isfinite(out)))
    print("KERNEL_OK")
</pallas_src>

<mosaic_0001>
module attributes {stable_mosaic.version = 11 : i64} {
  func.func @decoder_kernel(%arg0: memref<72x32xbf16, #tpu.memory_space<vmem>>, %arg1: memref<32x128xbf16, #tpu.memory_space<vmem>>, %arg2: memref<32x128xbf16, #tpu.memory_space<vmem>>, %arg3: memref<1x128xf32, #tpu.memory_space<vmem>>, %arg4: memref<32x256xbf16, #tpu.memory_space<vmem>>, %arg5: memref<1x256xf32, #tpu.memory_space<vmem>>, %arg6: memref<72x256xf32, #tpu.memory_space<vmem>>, %arg7: memref<72x128xf32, #tpu.memory_space<vmem>>) attributes {dimension_semantics = [], scalar_prefetch = 0 : i64, scratch_operands = 1 : i64, tpu.core_type = #tpu.core_type<tc>} {
    %c0 = arith.constant 0 : index
    %c0_0 = arith.constant 0 : index
    %0 = vector.load %arg0[%c0, %c0_0] : memref<72x32xbf16, #tpu.memory_space<vmem>>, vector<72x32xbf16>
    %c0_1 = arith.constant 0 : index
    %c0_2 = arith.constant 0 : index
    %1 = vector.load %arg1[%c0_1, %c0_2] : memref<32x128xbf16, #tpu.memory_space<vmem>>, vector<32x128xbf16>
    %cst = arith.constant dense<0.000000e+00> : vector<72x128xf32>
    %2 = tpu.matmul %0, %1, %cst {dimension_numbers = #tpu.dot_dimension_numbers<[1], [0], [0], [1], [0, 0, 1, 1], [], []>} : vector<72x32xbf16>, vector<32x128xbf16>, vector<72x128xf32> -> vector<72x128xf32>
    %c0_3 = arith.constant 0 : index
    %c0_4 = arith.constant 0 : index
    %3 = vector.load %arg3[%c0_3, %c0_4] : memref<1x128xf32, #tpu.memory_space<vmem>>, vector<1x128xf32>
    %4 = vector.broadcast %3 : vector<1x128xf32> to vector<72x128xf32>
    %5 = arith.addf %2, %4 : vector<72x128xf32>
    %c0_5 = arith.constant 0 : index
    %c0_6 = arith.constant 0 : index
    %6 = vector.load %arg7[%c0_5, %c0_6] : memref<72x128xf32, #tpu.memory_space<vmem>>, vector<72x128xf32>
    tpu.vector_store %arg7[%c0_5, %c0_6], %5 {strides = array<i32>} : memref<72x128xf32, #tpu.memory_space<vmem>>, vector<72x128xf32>,
    %c0_7 = arith.constant 0 : index
    %c0_8 = arith.constant 0 : index
    %7 = vector.load %arg2[%c0_7, %c0_8] : memref<32x128xbf16, #tpu.memory_space<vmem>>, vector<32x128xbf16>
    %c0_9 = arith.constant 0 : index
    %c0_10 = arith.constant 0 : index
    %8 = vector.load %arg4[%c0_9, %c0_10] : memref<32x256xbf16, #tpu.memory_space<vmem>>, vector<32x256xbf16>
    %c0_11 = arith.constant 0 : index
    %c0_12 = arith.constant 0 : index
    %9 = vector.load %arg5[%c0_11, %c0_12] : memref<1x256xf32, #tpu.memory_space<vmem>>, vector<1x256xf32>
    %cst_13 = arith.constant 0.000000e+00 : f32
    %10 = vector.broadcast %cst_13 : f32 to vector<8x32xf32>
    %cst_14 = arith.constant 0.000000e+00 : f32
    %11 = vector.broadcast %cst_14 : f32 to vector<8x32xf32>
    %c0_i32 = arith.constant 0 : i32
    %c8_i32 = arith.constant 8 : i32
    %12 = arith.muli %c0_i32, %c8_i32 : i32
    %13 = tpu.assume_multiple %12, 8 : i32
    %14 = arith.index_cast %13 : i32 to index
    %c0_15 = arith.constant 0 : index
    %15 = vector.load %arg7[%14, %c0_15] : memref<72x128xf32, #tpu.memory_space<vmem>>, vector<8x128xf32>
    %16 = arith.truncf %10 : vector<8x32xf32> to vector<8x32xbf16>
    %cst_16 = arith.constant dense<0.000000e+00> : vector<8x128xf32>
    %17 = tpu.matmul %16, %7, %cst_16 {dimension_numbers = #tpu.dot_dimension_numbers<[1], [0], [0], [1], [0, 0, 1, 1], [], []>} : vector<8x32xbf16>, vector<32x128xbf16>, vector<8x128xf32> -> vector<8x128xf32>
    %18 = arith.addf %15, %17 : vector<8x128xf32>
    %19 = arith.negf %18 : vector<8x128xf32>
    %20 = math.exp %19 : vector<8x128xf32>
    %cst_17 = arith.constant 1.000000e+00 : f32
    %21 = vector.broadcast %cst_17 : f32 to vector<8x128xf32>
    %22 = arith.addf %21, %20 : vector<8x128xf32>
    %23 = arith.divf %21, %22 : vector<8x128xf32>
    %24 = math.tanh %18 : vector<8x128xf32>
    %25 = vector.extract_strided_slice %23 {offsets = [0, 0], sizes = [8, 32], strides = [1, 1]} : vector<8x128xf32> to vector<8x32xf32>
    %26 = vector.extract_strided_slice %23 {offsets = [0, 32], sizes = [8, 32], strides = [1, 1]} : vector<8x128xf32> to vector<8x32xf32>
    %27 = vector.extract_strided_slice %24 {offsets = [0, 64], sizes = [8, 32], strides = [1, 1]} : vector<8x128xf32> to vector<8x32xf32>
    %28 = vector.extract_strided_slice %23 {offsets = [0, 96], sizes = [8, 32], strides = [1, 1]} : vector<8x128xf32> to vector<8x32xf32>
    %29 = arith.mulf %26, %11 : vector<8x32xf32>
    %30 = arith.mulf %25, %27 : vector<8x32xf32>
    %31 = arith.addf %29, %30 : vector<8x32xf32>
    %32 = math.tanh %31 : vector<8x32xf32>
    %33 = arith.mulf %28, %32 : vector<8x32xf32>
    %34 = arith.truncf %33 : vector<8x32xf32> to vector<8x32xbf16>
    %cst_18 = arith.constant dense<0.000000e+00> : vector<8x256xf32>
    %35 = tpu.matmul %34, %8, %cst_18 {dimension_numbers = #tpu.dot_dimension_numbers<[1], [0], [0], [1], [0, 0, 1, 1], [], []>} : vector<8x32xbf16>, vector<32x256xbf16>, vector<8x256xf32> -> vector<8x256xf32>
    %36 = vector.broadcast %9 : vector<1x256xf32> to vector<8x256xf32>
    %37 = arith.addf %35, %36 : vector<8x256xf32>
    %38 = arith.index_cast %13 : i32 to index
    %c0_19 = arith.constant 0 : index
    %39 = vector.load %arg6[%38, %c0_19] : memref<72x256xf32, #tpu.memory_space<vmem>>, vector<8x256xf32>
    tpu.vector_store %arg6[%38, %c0_19], %37 {strides = array<i32>} : memref<72x256xf32, #tpu.memory_space<vmem>>, vector<8x256xf32>,
    %c1_i32 = arith.constant 1 : i32
    %c8_i32_20 = arith.constant 8 : i32
    %40 = arith.muli %c1_i32, %c8_i32_20 : i32
    %41 = tpu.assume_multiple %40, 8 : i32
    %42 = arith.index_cast %41 : i32 to index
    %c0_21 = arith.constant 0 : index
    %43 = vector.load %arg7[%42, %c0_21] : memref<72x128xf32, #tpu.memory_space<vmem>>, vector<8x128xf32>
    %44 = arith.truncf %33 : vector<8x32xf32> to vector<8x32xbf16>
    %cst_22 = arith.constant dense<0.000000e+00> : vector<8x128xf32>
    %45 = tpu.matmul %44, %7, %cst_22 {dimension_numbers = #tpu.dot_dimension_numbers<[1], [0], [0], [1], [0, 0, 1, 1], [], []>} : vector<8x32xbf16>, vector<32x128xbf16>, vector<8x128xf32> -> vector<8x128xf32>
    %46 = arith.addf %43, %45 : vector<8x128xf32>
    %47 = arith.negf %46 : vector<8x128xf32>
    %48 = math.exp %47 : vector<8x128xf32>
    %cst_23 = arith.constant 1.000000e+00 : f32
    %49 = vector.broadcast %cst_23 : f32 to vector<8x128xf32>
    %50 = arith.addf %49, %48 : vector<8x128xf32>
    %51 = arith.divf %49, %50 : vector<8x128xf32>
    %52 = math.tanh %46 : vector<8x128xf32>
    %53 = vector.extract_strided_slice %51 {offsets = [0, 0], sizes = [8, 32], strides = [1, 1]} : vector<8x128xf32> to vector<8x32xf32>
    %54 = vector.extract_strided_slice %51 {offsets = [0, 32], sizes = [8, 32], strides = [1, 1]} : vector<8x128xf32> to vector<8x32xf32>
    %55 = vector.extract_strided_slice %52 {offsets = [0, 64], sizes = [8, 32], strides = [1, 1]} : vector<8x128xf32> to vector<8x32xf32>
    %56 = vector.extract_strided_slice %51 {offsets = [0, 96], sizes = [8, 32], strides = [1, 1]} : vector<8x128xf32> to vector<8x32xf32>
    %57 = arith.mulf %54, %31 : vector<8x32xf32>
    %58 = arith.mulf %53, %55 : vector<8x32xf32>
    %59 = arith.addf %57, %58 : vector<8x32xf32>
    %60 = math.tanh %59 : vector<8x32xf32>
    %61 = arith.mulf %56, %60 : vector<8x32xf32>
    %62 = arith.truncf %61 : vector<8x32xf32> to vector<8x32xbf16>
    %cst_24 = arith.constant dense<0.000000e+00> : vector<8x256xf32>
    %63 = tpu.matmul %62, %8, %cst_24 {dimension_numbers = #tpu.dot_dimension_numbers<[1], [0], [0], [1], [0, 0, 1, 1], [], []>} : vector<8x32xbf16>, vector<32x256xbf16>, vector<8x256xf32> -> vector<8x256xf32>
    %64 = vector.broadcast %9 : vector<1x256xf32> to vector<8x256xf32>
    %65 = arith.addf %63, %64 : vector<8x256xf32>
    %66 = arith.index_cast %41 : i32 to index
    %c0_25 = arith.constant 0 : index
    %67 = vector.load %arg6[%66, %c0_25] : memref<72x256xf32, #tpu.memory_space<vmem>>, vector<8x256xf32>
    tpu.vector_store %arg6[%66, %c0_25], %65 {strides = array<i32>} : memref<72x256xf32, #tpu.memory_space<vmem>>, vector<8x256xf32>,
    %c2_i32 = arith.constant 2 : i32
    %c8_i32_26 = arith.constant 8 : i32
    %68 = arith.muli %c2_i32, %c8_i32_26 : i32
    %69 = tpu.assume_multiple %68, 8 : i32
    %70 = arith.index_cast %69 : i32 to index
    %c0_27 = arith.constant 0 : index
    %71 = vector.load %arg7[%70, %c0_27] : memref<72x128xf32, #tpu.memory_space<vmem>>, vector<8x128xf32>
    %72 = arith.truncf %61 : vector<8x32xf32> to vector<8x32xbf16>
    %cst_28 = arith.constant dense<0.000000e+00> : vector<8x128xf32>
    %73 = tpu.matmul %72, %7, %cst_28 {dimension_numbers = #tpu.dot_dimension_numbers<[1], [0], [0], [1], [0, 0, 1, 1], [], []>} : vector<8x32xbf16>, vector<32x128xbf16>, vector<8x128xf32> -> vector<8x128xf32>
    %74 = arith.addf %71, %73 : vector<8x128xf32>
    %75 = arith.negf %74 : vector<8x128xf32>
    %76 = math.exp %75 : vector<8x128xf32>
    %cst_29 = arith.constant 1.000000e+00 : f32
    %77 = vector.broadcast %cst_29 : f32 to vector<8x128xf32>
    %78 = arith.addf %77, %76 : vector<8x128xf32>
    %79 = arith.divf %77, %78 : vector<8x128xf32>
    %80 = math.tanh %74 : vector<8x128xf32>
    %81 = vector.extract_strided_slice %79 {offsets = [0, 0], sizes = [8, 32], strides = [1, 1]} : vector<8x128xf32> to vector<8x32xf32>
    %82 = vector.extract_strided_slice %79 {offsets = [0, 32], sizes = [8, 32], strides = [1, 1]} : vector<8x128xf32> to vector<8x32xf32>
    %83 = vector.extract_strided_slice %80 {offsets = [0, 64], sizes = [8, 32], strides = [1, 1]} : vector<8x128xf32> to vector<8x32xf32>
    %84 = vector.extract_strided_slice %79 {offsets = [0, 96], sizes = [8, 32], strides = [1, 1]} : vector<8x128xf32> to vector<8x32xf32>
    %85 = arith.mulf %82, %59 : vector<8x32xf32>
    %86 = arith.mulf %81, %83 : vector<8x32xf32>
    %87 = arith.addf %85, %86 : vector<8x32xf32>
    %88 = math.tanh %87 : vector<8x32xf32>
    %89 = arith.mulf %84, %88 : vector<8x32xf32>
    %90 = arith.truncf %89 : vector<8x32xf32> to vector<8x32xbf16>
    %cst_30 = arith.constant dense<0.000000e+00> : vector<8x256xf32>
    %91 = tpu.matmul %90, %8, %cst_30 {dimension_numbers = #tpu.dot_dimension_numbers<[1], [0], [0], [1], [0, 0, 1, 1], [], []>} : vector<8x32xbf16>, vector<32x256xbf16>, vector<8x256xf32> -> vector<8x256xf32>
    %92 = vector.broadcast %9 : vector<1x256xf32> to vector<8x256xf32>
    %93 = arith.addf %91, %92 : vector<8x256xf32>
    %94 = arith.index_cast %69 : i32 to index
    %c0_31 = arith.constant 0 : index
    %95 = vector.load %arg6[%94, %c0_31] : memref<72x256xf32, #tpu.memory_space<vmem>>, vector<8x256xf32>
    tpu.vector_store %arg6[%94, %c0_31], %93 {strides = array<i32>} : memref<72x256xf32, #tpu.memory_space<vmem>>, vector<8x256xf32>,
    %c3_i32 = arith.constant 3 : i32
    %c8_i32_32 = arith.constant 8 : i32
    %96 = arith.muli %c3_i32, %c8_i32_32 : i32
    %97 = tpu.assume_multiple %96, 8 : i32
    %98 = arith.index_cast %97 : i32 to index
    %c0_33 = arith.constant 0 : index
    %99 = vector.load %arg7[%98, %c0_33] : memref<72x128xf32, #tpu.memory_space<vmem>>, vector<8x128xf32>
    %100 = arith.truncf %89 : vector<8x32xf32> to vector<8x32xbf16>
    %cst_34 = arith.constant dense<0.000000e+00> : vector<8x128xf32>
    %101 = tpu.matmul %100, %7, %cst_34 {dimension_numbers = #tpu.dot_dimension_numbers<[1], [0], [0], [1], [0, 0, 1, 1], [], []>} : vector<8x32xbf16>, vector<32x128xbf16>, vector<8x128xf32> -> vector<8x128xf32>
    %102 = arith.addf %99, %101 : vector<8x128xf32>
    %103 = arith.negf %102 : vector<8x128xf32>
    %104 = math.exp %103 : vector<8x128xf32>
    %cst_35 = arith.constant 1.000000e+00 : f32
    %105 = vector.broadcast %cst_35 : f32 to vector<8x128xf32>
    %106 = arith.addf %105, %104 : vector<8x128xf32>
    %107 = arith.divf %105, %106 : vector<8x128xf32>
    %108 = math.tanh %102 : vector<8x128xf32>
    %109 = vector.extract_strided_slice %107 {offsets = [0, 0], sizes = [8, 32], strides = [1, 1]} : vector<8x128xf32> to vector<8x32xf32>
    %110 = vector.extract_strided_slice %107 {offsets = [0, 32], sizes = [8, 32], strides = [1, 1]} : vector<8x128xf32> to vector<8x32xf32>
    %111 = vector.extract_strided_slice %108 {offsets = [0, 64], sizes = [8, 32], strides = [1, 1]} : vector<8x128xf32> to vector<8x32xf32>
    %112 = vector.extract_strided_slice %107 {offsets = [0, 96], sizes = [8, 32], strides = [1, 1]} : vector<8x128xf32> to vector<8x32xf32>
    %113 = arith.mulf %110, %87 : vector<8x32xf32>
    %114 = arith.mulf %109, %111 : vector<8x32xf32>
    %115 = arith.addf %113, %114 : vector<8x32xf32>
    %116 = math.tanh %115 : vector<8x32xf32>
    %117 = arith.mulf %112, %116 : vector<8x32xf32>
    %118 = arith.truncf %117 : vector<8x32xf32> to vector<8x32xbf16>
    %cst_36 = arith.constant dense<0.000000e+00> : vector<8x256xf32>
    %119 = tpu.matmul %118, %8, %cst_36 {dimension_numbers = #tpu.dot_dimension_numbers<[1], [0], [0], [1], [0, 0, 1, 1], [], []>} : vector<8x32xbf16>, vector<32x256xbf16>, vector<8x256xf32> -> vector<8x256xf32>
    %120 = vector.broadcast %9 : vector<1x256xf32> to vector<8x256xf32>
    %121 = arith.addf %119, %120 : vector<8x256xf32>
    %122 = arith.index_cast %97 : i32 to index
    %c0_37 = arith.constant 0 : index
    %123 = vector.load %arg6[%122, %c0_37] : memref<72x256xf32, #tpu.memory_space<vmem>>, vector<8x256xf32>
    tpu.vector_store %arg6[%122, %c0_37], %121 {strides = array<i32>} : memref<72x256xf32, #tpu.memory_space<vmem>>, vector<8x256xf32>,
    %c4_i32 = arith.constant 4 : i32
    %c8_i32_38 = arith.constant 8 : i32
    %124 = arith.muli %c4_i32, %c8_i32_38 : i32
    %125 = tpu.assume_multiple %124, 8 : i32
    %126 = arith.index_cast %125 : i32 to index
    %c0_39 = arith.constant 0 : index
    %127 = vector.load %arg7[%126, %c0_39] : memref<72x128xf32, #tpu.memory_space<vmem>>, vector<8x128xf32>
    %128 = arith.truncf %117 : vector<8x32xf32> to vector<8x32xbf16>
    %cst_40 = arith.constant dense<0.000000e+00> : vector<8x128xf32>
    %129 = tpu.matmul %128, %7, %cst_40 {dimension_numbers = #tpu.dot_dimension_numbers<[1], [0], [0], [1], [0, 0, 1, 1], [], []>} : vector<8x32xbf16>, vector<32x128xbf16>, vector<8x128xf32> -> vector<8x128xf32>
    %130 = arith.addf %127, %129 : vector<8x128xf32>
    %131 = arith.negf %130 : vector<8x128xf32>
    %132 = math.exp %131 : vector<8x128xf32>
    %cst_41 = arith.constant 1.000000e+00 : f32
    %133 = vector.broadcast %cst_41 : f32 to vector<8x128xf32>
    %134 = arith.addf %133, %132 : vector<8x128xf32>
    %135 = arith.divf %133, %134 : vector<8x128xf32>
    %136 = math.tanh %130 : vector<8x128xf32>
    %137 = vector.extract_strided_slice %135 {offsets = [0, 0], sizes = [8, 32], strides = [1, 1]} : vector<8x128xf32> to vector<8x32xf32>
    %138 = vector.extract_strided_slice %135 {offsets = [0, 32], sizes = [8, 32], strides = [1, 1]} : vector<8x128xf32> to vector<8x32xf32>
    %139 = vector.extract_strided_slice %136 {offsets = [0, 64], sizes = [8, 32], strides = [1, 1]} : vector<8x128xf32> to vector<8x32xf32>
    %140 = vector.extract_strided_slice %135 {offsets = [0, 96], sizes = [8, 32], strides = [1, 1]} : vector<8x128xf32> to vector<8x32xf32>
    %141 = arith.mulf %138, %115 : vector<8x32xf32>
    %142 = arith.mulf %137, %139 : vector<8x32xf32>
    %143 = arith.addf %141, %142 : vector<8x32xf32>
    %144 = math.tanh %143 : vector<8x32xf32>
    %145 = arith.mulf %140, %144 : vector<8x32xf32>
    %146 = arith.truncf %145 : vector<8x32xf32> to vector<8x32xbf16>
    %cst_42 = arith.constant dense<0.000000e+00> : vector<8x256xf32>
    %147 = tpu.matmul %146, %8, %cst_42 {dimension_numbers = #tpu.dot_dimension_numbers<[1], [0], [0], [1], [0, 0, 1, 1], [], []>} : vector<8x32xbf16>, vector<32x256xbf16>, vector<8x256xf32> -> vector<8x256xf32>
    %148 = vector.broadcast %9 : vector<1x256xf32> to vector<8x256xf32>
    %149 = arith.addf %147, %148 : vector<8x256xf32>
    %150 = arith.index_cast %125 : i32 to index
    %c0_43 = arith.constant 0 : index
    %151 = vector.load %arg6[%150, %c0_43] : memref<72x256xf32, #tpu.memory_space<vmem>>, vector<8x256xf32>
    tpu.vector_store %arg6[%150, %c0_43], %149 {strides = array<i32>} : memref<72x256xf32, #tpu.memory_space<vmem>>, vector<8x256xf32>,
    %c5_i32 = arith.constant 5 : i32
    %c8_i32_44 = arith.constant 8 : i32
    %152 = arith.muli %c5_i32, %c8_i32_44 : i32
    %153 = tpu.assume_multiple %152, 8 : i32
    %154 = arith.index_cast %153 : i32 to index
    %c0_45 = arith.constant 0 : index
    %155 = vector.load %arg7[%154, %c0_45] : memref<72x128xf32, #tpu.memory_space<vmem>>, vector<8x128xf32>
    %156 = arith.truncf %145 : vector<8x32xf32> to vector<8x32xbf16>
    %cst_46 = arith.constant dense<0.000000e+00> : vector<8x128xf32>
    %157 = tpu.matmul %156, %7, %cst_46 {dimension_numbers = #tpu.dot_dimension_numbers<[1], [0], [0], [1], [0, 0, 1, 1], [], []>} : vector<8x32xbf16>, vector<32x128xbf16>, vector<8x128xf32> -> vector<8x128xf32>
    %158 = arith.addf %155, %157 : vector<8x128xf32>
    %159 = arith.negf %158 : vector<8x128xf32>
    %160 = math.exp %159 : vector<8x128xf32>
    %cst_47 = arith.constant 1.000000e+00 : f32
    %161 = vector.broadcast %cst_47 : f32 to vector<8x128xf32>
    %162 = arith.addf %161, %160 : vector<8x128xf32>
    %163 = arith.divf %161, %162 : vector<8x128xf32>
    %164 = math.tanh %158 : vector<8x128xf32>
    %165 = vector.extract_strided_slice %163 {offsets = [0, 0], sizes = [8, 32], strides = [1, 1]} : vector<8x128xf32> to vector<8x32xf32>
    %166 = vector.extract_strided_slice %163 {offsets = [0, 32], sizes = [8, 32], strides = [1, 1]} : vector<8x128xf32> to vector<8x32xf32>
    %167 = vector.extract_strided_slice %164 {offsets = [0, 64], sizes = [8, 32], strides = [1, 1]} : vector<8x128xf32> to vector<8x32xf32>
    %168 = vector.extract_strided_slice %163 {offsets = [0, 96], sizes = [8, 32], strides = [1, 1]} : vector<8x128xf32> to vector<8x32xf32>
    %169 = arith.mulf %166, %143 : vector<8x32xf32>
    %170 = arith.mulf %165, %167 : vector<8x32xf32>
    %171 = arith.addf %169, %170 : vector<8x32xf32>
    %172 = math.tanh %171 : vector<8x32xf32>
    %173 = arith.mulf %168, %172 : vector<8x32xf32>
    %174 = arith.truncf %173 : vector<8x32xf32> to vector<8x32xbf16>
    %cst_48 = arith.constant dense<0.000000e+00> : vector<8x256xf32>
    %175 = tpu.matmul %174, %8, %cst_48 {dimension_numbers = #tpu.dot_dimension_numbers<[1], [0], [0], [1], [0, 0, 1, 1], [], []>} : vector<8x32xbf16>, vector<32x256xbf16>, vector<8x256xf32> -> vector<8x256xf32>
    %176 = vector.broadcast %9 : vector<1x256xf32> to vector<8x256xf32>
    %177 = arith.addf %175, %176 : vector<8x256xf32>
    %178 = arith.index_cast %153 : i32 to index
    %c0_49 = arith.constant 0 : index
    %179 = vector.load %arg6[%178, %c0_49] : memref<72x256xf32, #tpu.memory_space<vmem>>, vector<8x256xf32>
    tpu.vector_store %arg6[%178, %c0_49], %177 {strides = array<i32>} : memref<72x256xf32, #tpu.memory_space<vmem>>, vector<8x256xf32>,
    %c6_i32 = arith.constant 6 : i32
    %c8_i32_50 = arith.constant 8 : i32
    %180 = arith.muli %c6_i32, %c8_i32_50 : i32
    %181 = tpu.assume_multiple %180, 8 : i32
    %182 = arith.index_cast %181 : i32 to index
    %c0_51 = arith.constant 0 : index
    %183 = vector.load %arg7[%182, %c0_51] : memref<72x128xf32, #tpu.memory_space<vmem>>, vector<8x128xf32>
    %184 = arith.truncf %173 : vector<8x32xf32> to vector<8x32xbf16>
    %cst_52 = arith.constant dense<0.000000e+00> : vector<8x128xf32>
    %185 = tpu.matmul %184, %7, %cst_52 {dimension_numbers = #tpu.dot_dimension_numbers<[1], [0], [0], [1], [0, 0, 1, 1], [], []>} : vector<8x32xbf16>, vector<32x128xbf16>, vector<8x128xf32> -> vector<8x128xf32>
    %186 = arith.addf %183, %185 : vector<8x128xf32>
    %187 = arith.negf %186 : vector<8x128xf32>
    %188 = math.exp %187 : vector<8x128xf32>
    %cst_53 = arith.constant 1.000000e+00 : f32
    %189 = vector.broadcast %cst_53 : f32 to vector<8x128xf32>
    %190 = arith.addf %189, %188 : vector<8x128xf32>
    %191 = arith.divf %189, %190 : vector<8x128xf32>
    %192 = math.tanh %186 : vector<8x128xf32>
    %193 = vector.extract_strided_slice %191 {offsets = [0, 0], sizes = [8, 32], strides = [1, 1]} : vector<8x128xf32> to vector<8x32xf32>
    %194 = vector.extract_strided_slice %191 {offsets = [0, 32], sizes = [8, 32], strides = [1, 1]} : vector<8x128xf32> to vector<8x32xf32>
    %195 = vector.extract_strided_slice %192 {offsets = [0, 64], sizes = [8, 32], strides = [1, 1]} : vector<8x128xf32> to vector<8x32xf32>
    %196 = vector.extract_strided_slice %191 {offsets = [0, 96], sizes = [8, 32], strides = [1, 1]} : vector<8x128xf32> to vector<8x32xf32>
    %197 = arith.mulf %194, %171 : vector<8x32xf32>
    %198 = arith.mulf %193, %195 : vector<8x32xf32>
    %199 = arith.addf %197, %198 : vector<8x32xf32>
    %200 = math.tanh %199 : vector<8x32xf32>
    %201 = arith.mulf %196, %200 : vector<8x32xf32>
    %202 = arith.truncf %201 : vector<8x32xf32> to vector<8x32xbf16>
    %cst_54 = arith.constant dense<0.000000e+00> : vector<8x256xf32>
    %203 = tpu.matmul %202, %8, %cst_54 {dimension_numbers = #tpu.dot_dimension_numbers<[1], [0], [0], [1], [0, 0, 1, 1], [], []>} : vector<8x32xbf16>, vector<32x256xbf16>, vector<8x256xf32> -> vector<8x256xf32>
    %204 = vector.broadcast %9 : vector<1x256xf32> to vector<8x256xf32>
    %205 = arith.addf %203, %204 : vector<8x256xf32>
    %206 = arith.index_cast %181 : i32 to index
    %c0_55 = arith.constant 0 : index
    %207 = vector.load %arg6[%206, %c0_55] : memref<72x256xf32, #tpu.memory_space<vmem>>, vector<8x256xf32>
    tpu.vector_store %arg6[%206, %c0_55], %205 {strides = array<i32>} : memref<72x256xf32, #tpu.memory_space<vmem>>, vector<8x256xf32>,
    %c7_i32 = arith.constant 7 : i32
    %c8_i32_56 = arith.constant 8 : i32
    %208 = arith.muli %c7_i32, %c8_i32_56 : i32
    %209 = tpu.assume_multiple %208, 8 : i32
    %210 = arith.index_cast %209 : i32 to index
    %c0_57 = arith.constant 0 : index
    %211 = vector.load %arg7[%210, %c0_57] : memref<72x128xf32, #tpu.memory_space<vmem>>, vector<8x128xf32>
    %212 = arith.truncf %201 : vector<8x32xf32> to vector<8x32xbf16>
    %cst_58 = arith.constant dense<0.000000e+00> : vector<8x128xf32>
    %213 = tpu.matmul %212, %7, %cst_58 {dimension_numbers = #tpu.dot_dimension_numbers<[1], [0], [0], [1], [0, 0, 1, 1], [], []>} : vector<8x32xbf16>, vector<32x128xbf16>, vector<8x128xf32> -> vector<8x128xf32>
    %214 = arith.addf %211, %213 : vector<8x128xf32>
    %215 = arith.negf %214 : vector<8x128xf32>
    %216 = math.exp %215 : vector<8x128xf32>
    %cst_59 = arith.constant 1.000000e+00 : f32
    %217 = vector.broadcast %cst_59 : f32 to vector<8x128xf32>
    %218 = arith.addf %217, %216 : vector<8x128xf32>
    %219 = arith.divf %217, %218 : vector<8x128xf32>
    %220 = math.tanh %214 : vector<8x128xf32>
    %221 = vector.extract_strided_slice %219 {offsets = [0, 0], sizes = [8, 32], strides = [1, 1]} : vector<8x128xf32> to vector<8x32xf32>
    %222 = vector.extract_strided_slice %219 {offsets = [0, 32], sizes = [8, 32], strides = [1, 1]} : vector<8x128xf32> to vector<8x32xf32>
    %223 = vector.extract_strided_slice %220 {offsets = [0, 64], sizes = [8, 32], strides = [1, 1]} : vector<8x128xf32> to vector<8x32xf32>
    %224 = vector.extract_strided_slice %219 {offsets = [0, 96], sizes = [8, 32], strides = [1, 1]} : vector<8x128xf32> to vector<8x32xf32>
    %225 = arith.mulf %222, %199 : vector<8x32xf32>
    %226 = arith.mulf %221, %223 : vector<8x32xf32>
    %227 = arith.addf %225, %226 : vector<8x32xf32>
    %228 = math.tanh %227 : vector<8x32xf32>
    %229 = arith.mulf %224, %228 : vector<8x32xf32>
    %230 = arith.truncf %229 : vector<8x32xf32> to vector<8x32xbf16>
    %cst_60 = arith.constant dense<0.000000e+00> : vector<8x256xf32>
    %231 = tpu.matmul %230, %8, %cst_60 {dimension_numbers = #tpu.dot_dimension_numbers<[1], [0], [0], [1], [0, 0, 1, 1], [], []>} : vector<8x32xbf16>, vector<32x256xbf16>, vector<8x256xf32> -> vector<8x256xf32>
    %232 = vector.broadcast %9 : vector<1x256xf32> to vector<8x256xf32>
    %233 = arith.addf %231, %232 : vector<8x256xf32>
    %234 = arith.index_cast %209 : i32 to index
    %c0_61 = arith.constant 0 : index
    %235 = vector.load %arg6[%234, %c0_61] : memref<72x256xf32, #tpu.memory_space<vmem>>, vector<8x256xf32>
    tpu.vector_store %arg6[%234, %c0_61], %233 {strides = array<i32>} : memref<72x256xf32, #tpu.memory_space<vmem>>, vector<8x256xf32>,
    %c8_i32_62 = arith.constant 8 : i32
    %c8_i32_63 = arith.constant 8 : i32
    %236 = arith.muli %c8_i32_62, %c8_i32_63 : i32
    %237 = tpu.assume_multiple %236, 8 : i32
    %238 = arith.index_cast %237 : i32 to index
    %c0_64 = arith.constant 0 : index
    %239 = vector.load %arg7[%238, %c0_64] : memref<72x128xf32, #tpu.memory_space<vmem>>, vector<8x128xf32>
    %240 = arith.truncf %229 : vector<8x32xf32> to vector<8x32xbf16>
    %cst_65 = arith.constant dense<0.000000e+00> : vector<8x128xf32>
    %241 = tpu.matmul %240, %7, %cst_65 {dimension_numbers = #tpu.dot_dimension_numbers<[1], [0], [0], [1], [0, 0, 1, 1], [], []>} : vector<8x32xbf16>, vector<32x128xbf16>, vector<8x128xf32> -> vector<8x128xf32>
    %242 = arith.addf %239, %241 : vector<8x128xf32>
    %243 = arith.negf %242 : vector<8x128xf32>
    %244 = math.exp %243 : vector<8x128xf32>
    %cst_66 = arith.constant 1.000000e+00 : f32
    %245 = vector.broadcast %cst_66 : f32 to vector<8x128xf32>
    %246 = arith.addf %245, %244 : vector<8x128xf32>
    %247 = arith.divf %245, %246 : vector<8x128xf32>
    %248 = math.tanh %242 : vector<8x128xf32>
    %249 = vector.extract_strided_slice %247 {offsets = [0, 0], sizes = [8, 32], strides = [1, 1]} : vector<8x128xf32> to vector<8x32xf32>
    %250 = vector.extract_strided_slice %247 {offsets = [0, 32], sizes = [8, 32], strides = [1, 1]} : vector<8x128xf32> to vector<8x32xf32>
    %251 = vector.extract_strided_slice %248 {offsets = [0, 64], sizes = [8, 32], strides = [1, 1]} : vector<8x128xf32> to vector<8x32xf32>
    %252 = vector.extract_strided_slice %247 {offsets = [0, 96], sizes = [8, 32], strides = [1, 1]} : vector<8x128xf32> to vector<8x32xf32>
    %253 = arith.mulf %250, %227 : vector<8x32xf32>
    %254 = arith.mulf %249, %251 : vector<8x32xf32>
    %255 = arith.addf %253, %254 : vector<8x32xf32>
    %256 = math.tanh %255 : vector<8x32xf32>
    %257 = arith.mulf %252, %256 : vector<8x32xf32>
    %258 = arith.truncf %257 : vector<8x32xf32> to vector<8x32xbf16>
    %cst_67 = arith.constant dense<0.000000e+00> : vector<8x256xf32>
    %259 = tpu.matmul %258, %8, %cst_67 {dimension_numbers = #tpu.dot_dimension_numbers<[1], [0], [0], [1], [0, 0, 1, 1], [], []>} : vector<8x32xbf16>, vector<32x256xbf16>, vector<8x256xf32> -> vector<8x256xf32>
    %260 = vector.broadcast %9 : vector<1x256xf32> to vector<8x256xf32>
    %261 = arith.addf %259, %260 : vector<8x256xf32>
    %262 = arith.index_cast %237 : i32 to index
    %c0_68 = arith.constant 0 : index
    %263 = vector.load %arg6[%262, %c0_68] : memref<72x256xf32, #tpu.memory_space<vmem>>, vector<8x256xf32>
    tpu.vector_store %arg6[%262, %c0_68], %261 {strides = array<i32>} : memref<72x256xf32, #tpu.memory_space<vmem>>, vector<8x256xf32>,
    %c9_i32 = arith.constant 9 : i32
    return
  }
}

</mosaic_0001>

<llo_original>
// kernel: tpu_custom_call.1
$region0: #{tpu_custom_call.1}
  #allocation0 [shape = 'u32[]', space=smem, size = 0x4, offset = 0x4, fixed_abs, tag = 'smem constant byte address 0x4 - core index']
  #allocation1 [shape = 'u32[144,128]{1,0:T(1,128)}', space=vmem, size = 0x12000, scoped, tag = 'internal scratch']
  #allocation2 [shape = 'f32[72,128]{1,0:T(8,128)}', space=vmem, size = 0x9000, scoped, tag = 'scratch operand']
  %s0 = inlined_call_operand.vmem [shape: bf16[72,32], index: 0, kind: input, shape index: {}]
  %s1 = inlined_call_operand.vmem [shape: bf16[32,128], index: 1, kind: input, shape index: {}]
  %s2 = inlined_call_operand.hbm [shape: bf16[32,128], index: 2, kind: input, shape index: {}]
  %s3 = inlined_call_operand.vmem [shape: f32[1,128], index: 3, kind: input, shape index: {}]
  %s4 = inlined_call_operand.vmem [shape: bf16[32,256], index: 4, kind: input, shape index: {}]
  %s5 = inlined_call_operand.vmem [shape: f32[1,256], index: 5, kind: input, shape index: {}]
  %s6 = inlined_call_operand.hbm [shape: f32[72,256], index: 6, kind: output, shape index: {}]
  %s7 = sld [smem:[#allocation0]]
  $region38: #{tpu_custom_call.1} parent=0
    _
  %s9 = ssub.s32 1, %s7
  %s10 = scalar_select 0, %s9, %s7
  $region1: #{tpu_custom_call.1} parent=0
    #allocation3 [shape = 'u8[8192]{0}', space=vmem, size = 0x2000, scoped, tag = 'input window, operand 2, single buffered']
    #allocation4 [shape = 's32[1]{0}', space=sflag, size = 0x4, scoped, tag = 'scoped memory for tpu_custom_call.1']
    #allocation5 [shape = 's32[1]{0}', space=sflag, size = 0x4, scoped, tag = 'scoped memory for tpu_custom_call.1']
    #allocation6 [shape = 'u8[73728]{0}', space=vmem, size = 0x12000, scoped, tag = 'output window, operand 0, single buffered']
    %11 = vsyncpa [#allocation4], 0
    %12 = vsyncpa [#allocation5], 0
    // Predicated region
    $region2: #{tpu_custom_call.1} parent=1 // pred_check
      _
    $region3: #{tpu_custom_call.1} parent=1 // pred_check_branch
      %14 = sbr.rel (0) target = $region5
    $region4: #{tpu_custom_call.1} parent=1 // pred_region
      _
    $region5: #{tpu_custom_call.1} parent=1 // pred_fallthru
      _
    // Predicated region
    $region6: #{tpu_custom_call.1} parent=1 // pred_check
      _
    $region7: #{tpu_custom_call.1} parent=1 // pred_check_branch
      %16 = sbr.rel (0) target = $region9
    $region8: #{tpu_custom_call.1} parent=1 // pred_region
      _
    $region9: #{tpu_custom_call.1} parent=1 // pred_fallthru
      _
    // Predicated region
    $region10: #{tpu_custom_call.1} parent=1 // pred_check
      _
    $region11: #{tpu_custom_call.1} parent=1 // pred_check_branch
      %18 = sbr.rel (0) target = $region13
    $region12: #{tpu_custom_call.1} parent=1 // pred_region
      %s20 = ssub.s32 256, 256
      %21 = vsyncadd [#allocation4], %s20
      %s22 = sshll.u32 [#allocation3], 4
      %s23 = int_to_ptr.vmem [resolvable:$true] %s22
      %28 = dma.hbm_to_vmem [thread:$0]  %s2, 256, %s23, [#allocation4], 64, 64, 4
    $region13: #{tpu_custom_call.1} parent=1 // pred_fallthru
      _
    // Predicated region
    $region14: #{tpu_custom_call.1} parent=1 // pred_check
      _
    $region15: #{tpu_custom_call.1} parent=1 // pred_check_branch
      %30 = sbr.rel (0) target = $region17
    $region16: #{tpu_custom_call.1} parent=1 // pred_region
      _
    $region17: #{tpu_custom_call.1} parent=1 // pred_fallthru
      _
    // Predicated region
    $region18: #{tpu_custom_call.1} parent=1 // pred_check
      _
    $region19: #{tpu_custom_call.1} parent=1 // pred_check_branch
      %32 = sbr.rel (0) target = $region21
    $region20: #{tpu_custom_call.1} parent=1 // pred_region
      _
    $region21: #{tpu_custom_call.1} parent=1 // pred_fallthru
      _
    // Predicated region
    $region22: #{tpu_custom_call.1} parent=1 // pred_check
      _
    $region23: #{tpu_custom_call.1} parent=1 // pred_check_branch
      %34 = sbr.rel (0) target = $region25
    $region24: #{tpu_custom_call.1} parent=1 // pred_region
      _
    $region25: #{tpu_custom_call.1} parent=1 // pred_fallthru
      _
    // Predicated region
    $region26: #{tpu_custom_call.1} parent=1 // pred_check
      _
    $region27: #{tpu_custom_call.1} parent=1 // pred_check_branch
      %36 = sbr.rel (0) target = $region29
    $region28: #{tpu_custom_call.1} parent=1 // pred_region
      %37 = dma.done [#allocation4], 256
    $region29: #{tpu_custom_call.1} parent=1 // pred_fallthru
      _
    %v39 = vld [vmem:[%s0] sm:$0xf]
    %v40 = vld [vmem:[%s0 + $0x4] sm:$0xf]
    %v41 = vld [vmem:[%s0 + $0x8] sm:$0xf]
    %v42 = vld [vmem:[%s0 + $0xc] sm:$0xf]
    %v43 = vld [vmem:[%s0 + $0x10] sm:$0xf]
    %v44 = vld [vmem:[%s0 + $0x14] sm:$0xf]
    %v45 = vld [vmem:[%s0 + $0x18] sm:$0xf]
    %v46 = vld [vmem:[%s0 + $0x1c] sm:$0xf]
    %v47 = vld [vmem:[%s0 + $0x20] sm:$0xf]
    %v48 = vld [vmem:[%s1] sm:$0xf]
    %v49 = vld [vmem:[%s1 + $0x4] sm:$0xf]
    %v50 = vld [vmem:[%s1 + $0x8] sm:$0xf]
    %v51 = vld [vmem:[%s1 + $0xc] sm:$0xf]
    %v52 = vld [vmem:[%s3] sm:$0x1]
    %v54 = vlaneseq
    %v55 = vshrl.u32 %v54, 7
    %v56 = vsub.s32 0, %v55
    %v57 = vrot.slane %v52, %v56
    %v68 = vunpack.c.l.b16 %v39
    %v69 = vunpack.c.l.b16 %v40
    %v70 = vunpack.c.l.b16 %v41
    %v71 = vunpack.c.l.b16 %v42
    %v72 = vunpack.c.l.b16 %v43
    %v73 = vunpack.c.l.b16 %v44
    %v74 = vunpack.c.l.b16 %v45
    %v75 = vunpack.c.l.b16 %v46
    %v76 = vunpack.c.l.b16 %v47
    %v77 = vpack.c.b16 %v69, %v68
    %v78 = vpack.c.b16 %v71, %v70
    %v79 = vpack.c.b16 %v73, %v72
    %v80 = vpack.c.b16 %v75, %v74
    %v81 = vpack.c.b16 %v76, %v76
    %v86 = vunpack.c.l.b16 %v48
    %v87 = vunpack.c.l.b16 %v49
    %v88 = vunpack.c.l.b16 %v50
    %v89 = vunpack.c.l.b16 %v51
    %v90 = vpack.c.b16 %v87, %v86
    %v91 = vpack.c.b16 %v89, %v88
    %vm94 = vcmask 261120
    %v96 = vsel %vm94, %v77, 0
    %v99 = vsel %vm94, %v78, 0
    %v102 = vsel %vm94, %v79, 0
    %v105 = vsel %vm94, %v80, 0
    %v108 = vsel %vm94, %v81, 0
    %110 = vmatprep.subr.bf16.mxu0 0
    %111 = vmatpush1.bf16.msra.mxu0 0
    %112 = vmatprep.subr.bf16.mxu0 0
    %113 = vmatpush1.bf16.msra.mxu0 0
    %114 = vmatprep.subr.bf16.mxu0 0
    %115 = vmatpush1.bf16.msra.mxu0 0
    %116 = vmatprep.subr.bf16.mxu0 0
    %117 = vmatpush1.bf16.msra.mxu0 0
    %118 = vmatprep.subr.bf16.mxu0 0
    %119 = vmatpush1.bf16.msra.mxu0 0
    %120 = vmatprep.subr.bf16.mxu0 0
    %121 = vmatpush1.bf16.msra.mxu0 0
    %122 = vmatprep.subr.bf16.mxu0 0
    %123 = vmatpush1.bf16.msra.mxu0 %v91
    %124 = vmatprep.subr.bf16.mxu0 0
    %125 = vmatpush1.bf16.msra.mxu0 %v90
    %126 = vmatprep.subr.bf16.mxu0 0
    %127 = vmatpush2.bf16.msra.mxu0 0
    %128 = vmatprep.subr.bf16.mxu0 0
    %129 = vmatpush2.bf16.msra.mxu0 0
    %130 = vmatprep.subr.bf16.mxu0 0
    %131 = vmatpush2.bf16.msra.mxu0 0
    %132 = vmatprep.subr.bf16.mxu0 0
    %133 = vmatpush2.bf16.msra.mxu0 0
    %134 = vmatprep.subr.bf16.mxu0 0
    %135 = vmatpush2.bf16.msra.mxu0 0
    %136 = vmatprep.subr.bf16.mxu0 0
    %137 = vmatpush2.bf16.msra.mxu0 0
    %138 = vmatprep.subr.bf16.mxu0 0
    %139 = vmatpush2.bf16.msra.mxu0 0
    %140 = vmatprep.subr.bf16.mxu0 0
    %141 = vmatpush2.bf16.msra.mxu0 0
    %142 = vmatprep.mubr.bf16.mxu0 0
    %143 = vmatmul.mubr.bf16.gmra.mxu0 %v96
    %v144 = vpop.f32.mrf.mxu0
    %v145 = vadd.f32 %v57, %v144
    %v146 = vpop.f32.mrf.mxu0
    %v147 = vpop.f32.mrf.mxu0
    %v148 = vadd.f32 %v57, %v147
    %v149 = vpop.f32.mrf.mxu0
    %150 = vmatprep.mubr.bf16.mxu0 0
    %151 = vmatmul.mubr.bf16.gmra.mxu0 %v99
    %v152 = vpop.f32.mrf.mxu0
    %v153 = vadd.f32 %v57, %v152
    %v154 = vpop.f32.mrf.mxu0
    %v155 = vpop.f32.mrf.mxu0
    %v156 = vadd.f32 %v57, %v155
    %v157 = vpop.f32.mrf.mxu0
    %158 = vmatprep.mubr.bf16.mxu0 0
    %159 = vmatmul.mubr.bf16.gmra.mxu0 %v102
    %v160 = vpop.f32.mrf.mxu0
    %v161 = vadd.f32 %v57, %v160
    %v162 = vpop.f32.mrf.mxu0
    %v163 = vpop.f32.mrf.mxu0
    %v164 = vadd.f32 %v57, %v163
    %v165 = vpop.f32.mrf.mxu0
    %166 = vmatprep.mubr.bf16.mxu0 0
    %167 = vmatmul.mubr.bf16.gmra.mxu0 %v105
    %v168 = vpop.f32.mrf.mxu0
    %v169 = vadd.f32 %v57, %v168
    %v170 = vpop.f32.mrf.mxu0
    %v171 = vpop.f32.mrf.mxu0
    %v172 = vadd.f32 %v57, %v171
    %v173 = vpop.f32.mrf.mxu0
    %174 = vmatprep.mubr.bf16.mxu0 0
    %175 = vmatmul.mubr.bf16.gmra.mxu0 %v108
    %v176 = vpop.f32.mrf.mxu0
    %v177 = vadd.f32 %v57, %v176
    %v178 = vpop.f32.mrf.mxu0
    %v179 = vpop.f32.mrf.mxu0
    %v180 = vpop.f32.mrf.mxu0
    %181 = vdwg.mxu0
    %182 = vst [vmem:[#allocation2] sm:$0xff] %v145
    %183 = vst [vmem:[#allocation2 + $0x8] sm:$0xff] %v148
    %184 = vst [vmem:[#allocation2 + $0x10] sm:$0xff] %v153
    %185 = vst [vmem:[#allocation2 + $0x18] sm:$0xff] %v156
    %186 = vst [vmem:[#allocation2 + $0x20] sm:$0xff] %v161
    %187 = vst [vmem:[#allocation2 + $0x28] sm:$0xff] %v164
    %188 = vst [vmem:[#allocation2 + $0x30] sm:$0xff] %v169
    %189 = vst [vmem:[#allocation2 + $0x38] sm:$0xff] %v172
    %190 = vst [vmem:[#allocation2 + $0x40] sm:$0xff] %v177
    %v191 = vld [vmem:[#allocation3] sm:$0xf]
    %v192 = vld [vmem:[#allocation3 + $0x4] sm:$0xf]
    %v193 = vld [vmem:[#allocation3 + $0x8] sm:$0xf]
    %v194 = vld [vmem:[#allocation3 + $0xc] sm:$0xf]
    %v195 = vld [vmem:[%s4] sm:$0xff]
    %v196 = vld [vmem:[%s4 + $0x8] sm:$0xff]
    %v197 = vld [vmem:[%s4 + $0x10] sm:$0xff]
    %v198 = vld [vmem:[%s4 + $0x18] sm:$0xff]
    %v199 = vld [vmem:[%s5] sm:$0x3]
    %v200 = vld [vmem:[#allocation2] sm:$0xff]
    %v205 = vunpack.c.l.b16 %v191
    %v206 = vunpack.c.l.b16 %v192
    %v207 = vunpack.c.l.b16 %v193
    %v208 = vunpack.c.l.b16 %v194
    %v209 = vpack.c.b16 %v206, %v205
    %v210 = vpack.c.b16 %v208, %v207
    %v214 = vsel %vm94, 0, 0
    %216 = vmatprep.subr.bf16.mxu0 0
    %217 = vmatpush1.bf16.msra.mxu0 0
    %218 = vmatprep.subr.bf16.mxu0 0
    %219 = vmatpush1.bf16.msra.mxu0 0
    %220 = vmatprep.subr.bf16.mxu0 0
    %221 = vmatpush1.bf16.msra.mxu0 0
    %222 = vmatprep.subr.bf16.mxu0 0
    %223 = vmatpush1.bf16.msra.mxu0 0
    %224 = vmatprep.subr.bf16.mxu0 0
    %225 = vmatpush1.bf16.msra.mxu0 0
    %226 = vmatprep.subr.bf16.mxu0 0
    %227 = vmatpush1.bf16.msra.mxu0 0
    %228 = vmatprep.subr.bf16.mxu0 0
    %229 = vmatpush1.bf16.msra.mxu0 %v210
    %230 = vmatprep.subr.bf16.mxu0 0
    %231 = vmatpush1.bf16.msra.mxu0 %v209
    %232 = vmatprep.subr.bf16.mxu0 0
    %233 = vmatpush2.bf16.msra.mxu0 0
    %234 = vmatprep.subr.bf16.mxu0 0
    %235 = vmatpush2.bf16.msra.mxu0 0
    %236 = vmatprep.subr.bf16.mxu0 0
    %237 = vmatpush2.bf16.msra.mxu0 0
    %238 = vmatprep.subr.bf16.mxu0 0
    %239 = vmatpush2.bf16.msra.mxu0 0
    %240 = vmatprep.subr.bf16.mxu0 0
    %241 = vmatpush2.bf16.msra.mxu0 0
    %242 = vmatprep.subr.bf16.mxu0 0
    %243 = vmatpush2.bf16.msra.mxu0 0
    %244 = vmatprep.subr.bf16.mxu0 0
    %245 = vmatpush2.bf16.msra.mxu0 0
    %246 = vmatprep.subr.bf16.mxu0 0
    %247 = vmatpush2.bf16.msra.mxu0 0
    %248 = vmatprep.mubr.bf16.mxu0 0
    %249 = vmatmul.mubr.bf16.gmra.mxu0 %v214
    %v250 = vpop.f32.mrf.mxu0
    %v251 = vadd.f32 0.0, %v250
    %v252 = vpop.f32.mrf.mxu0
    %v253 = vpop.f32.mrf.mxu0
    %v254 = vpop.f32.mrf.mxu0
    %255 = vdwg.mxu0
    %v256 = vadd.f32 %v200, %v251
    %v257 = vxor.u32 %v256, 2147483648
    %v258 = vmul.f32 %v257, 1.442695
    %v259 = vpow.pop %v258
    %v260 = vadd.f32 %v259, 1.0
    %v261 = vrcp.pop %v260
    %v262 = vmul.f32 1.0, %v261
    %v263 = vtanh.pop %v256
    %v264 = vmul.f32 %v262, 0.0
    %266 = vrot.lane.b32.xlu0 %v263, 64
    %v267 = vpop.permute.xlu0 %266
    %v269 = vmul.f32 %v262, %v267
    %271 = vrot.lane.b32.xlu0 %v269, 32
    %v272 = vpop.permute.xlu0 %271
    %v274 = vadd.f32 %v264, %v272
    %v275 = vtanh.pop %v274
    %277 = vrot.lane.b32.xlu0 %v275, 64
    %v278 = vpop.permute.xlu0 %277
    %v280 = vmul.f32 %v262, %v278
    %v281 = vpack.c.bf16 %v280, %v280
    %v283 = vlaneseq
    %v284 = vshrl.u32 %v283, 7
    %v285 = vsub.s32 0, %v284
    %v286 = vrot.slane %v199, %v285
    %v287 = vlaneseq
    %v288 = vshrl.u32 %v287, 7
    %v289 = vsub.s32 1, %v288
    %v290 = vrot.slane %v199, %v289
    %294 = vrot.lane.b32.xlu0 %v281, 32
    %v295 = vpop.permute.xlu0 %294
    %v300 = vunpack.c.l.b16 %v195
    %v301 = vunpack.c.h.b16 %v195
    %v302 = vunpack.c.l.b16 %v196
    %v303 = vunpack.c.h.b16 %v196
    %v304 = vunpack.c.l.b16 %v197
    %v305 = vunpack.c.h.b16 %v197
    %v306 = vunpack.c.l.b16 %v198
    %v307 = vunpack.c.h.b16 %v198
    %v308 = vpack.c.b16 %v302, %v300
    %v309 = vpack.c.b16 %v303, %v301
    %v310 = vpack.c.b16 %v306, %v304
    %v311 = vpack.c.b16 %v307, %v305
    %v317 = vsel %vm94, %v295, 0
    %319 = vmatprep.subr.bf16.mxu0 0
    %320 = vmatpush1.bf16.msra.mxu0 0
    %321 = vmatprep.subr.bf16.mxu0 0
    %322 = vmatpush1.bf16.msra.mxu0 0
    %323 = vmatprep.subr.bf16.mxu0 0
    %324 = vmatpush1.bf16.msra.mxu0 0
    %325 = vmatprep.subr.bf16.mxu0 0
    %326 = vmatpush1.bf16.msra.mxu0 0
    %327 = vmatprep.subr.bf16.mxu0 0
    %328 = vmatpush1.bf16.msra.mxu0 0
    %329 = vmatprep.subr.bf16.mxu0 0
    %330 = vmatpush1.bf16.msra.mxu0 0
    %331 = vmatprep.subr.bf16.mxu0 %v311
    %332 = vmatpush1.bf16.msra.mxu0 %v310
    %333 = vmatprep.subr.bf16.mxu0 %v309
    %334 = vmatpush1.bf16.msra.mxu0 %v308
    %335 = vmatprep.subr.bf16.mxu0 0
    %336 = vmatpush2.bf16.msra.mxu0 0
    %337 = vmatprep.subr.bf16.mxu0 0
    %338 = vmatpush2.bf16.msra.mxu0 0
    %339 = vmatprep.subr.bf16.mxu0 0
    %340 = vmatpush2.bf16.msra.mxu0 0
    %341 = vmatprep.subr.bf16.mxu0 0
    %342 = vmatpush2.bf16.msra.mxu0 0
    %343 = vmatprep.subr.bf16.mxu0 0
    %344 = vmatpush2.bf16.msra.mxu0 0
    %345 = vmatprep.subr.bf16.mxu0 0
    %346 = vmatpush2.bf16.msra.mxu0 0
    %347 = vmatprep.subr.bf16.mxu0 0
    %348 = vmatpush2.bf16.msra.mxu0 0
    %349 = vmatprep.subr.bf16.mxu0 0
    %350 = vmatpush2.bf16.msra.mxu0 0
    %351 = vmatprep.mubr.bf16.mxu0 0
    %352 = vmatmul.mubr.bf16.gmra.mxu0 %v317
    %v353 = vpop.f32.mrf.mxu0
    %v354 = vadd.f32 %v286, %v353
    %v355 = vpop.f32.mrf.mxu0
    %v356 = vadd.f32 %v290, %v355
    %v357 = vpop.f32.mrf.mxu0
    %v358 = vpop.f32.mrf.mxu0
    %359 = vdwg.mxu0
    %s360 = smul.u32 0, 2
    %s361 = smul.addr %s360, 8
    %s362 = scalar_lea.vmem [#allocation6], %s361
    %363 = vst [vmem:[%s362] sm:$0xff] %v354
    %364 = vst [vmem:[%s362 + $0x8] sm:$0xff] %v356
    %s365 = scalar_lea.vmem [#allocation2], 8
    %v366 = vld [vmem:[%s365] sm:$0xff]
    %367 = vmatprep.subr.bf16.mxu0 0
    %368 = vmatpush1.bf16.msra.mxu0 0
    %369 = vmatprep.subr.bf16.mxu0 0
    %370 = vmatpush1.bf16.msra.mxu0 0
    %371 = vmatprep.subr.bf16.mxu0 0
    %372 = vmatpush1.bf16.msra.mxu0 0
    %373 = vmatprep.subr.bf16.mxu0 0
    %374 = vmatpush1.bf16.msra.mxu0 0
    %375 = vmatprep.subr.bf16.mxu0 0
    %376 = vmatpush1.bf16.msra.mxu0 0
    %377 = vmatprep.subr.bf16.mxu0 0
    %378 = vmatpush1.bf16.msra.mxu0 0
    %379 = vmatprep.subr.bf16.mxu0 0
    %380 = vmatpush1.bf16.msra.mxu0 %v210
    %381 = vmatprep.subr.bf16.mxu0 0
    %382 = vmatpush1.bf16.msra.mxu0 %v209
    %383 = vmatprep.subr.bf16.mxu0 0
    %384 = vmatpush2.bf16.msra.mxu0 0
    %385 = vmatprep.subr.bf16.mxu0 0
    %386 = vmatpush2.bf16.msra.mxu0 0
    %387 = vmatprep.subr.bf16.mxu0 0
    %388 = vmatpush2.bf16.msra.mxu0 0
    %389 = vmatprep.subr.bf16.mxu0 0
    %390 = vmatpush2.bf16.msra.mxu0 0
    %391 = vmatprep.subr.bf16.mxu0 0
    %392 = vmatpush2.bf16.msra.mxu0 0
    %393 = vmatprep.subr.bf16.mxu0 0
    %394 = vmatpush2.bf16.msra.mxu0 0
    %395 = vmatprep.subr.bf16.mxu0 0
    %396 = vmatpush2.bf16.msra.mxu0 0
    %397 = vmatprep.subr.bf16.mxu0 0
    %398 = vmatpush2.bf16.msra.mxu0 0
    %399 = vmatprep.mubr.bf16.mxu0 0
    %400 = vmatmul.mubr.bf16.gmra.mxu0 %v317
    %v401 = vpop.f32.mrf.mxu0
    %v402 = vadd.f32 0.0, %v401
    %v403 = vpop.f32.mrf.mxu0
    %v404 = vpop.f32.mrf.mxu0
    %v405 = vpop.f32.mrf.mxu0
    %406 = vdwg.mxu0
    %v407 = vadd.f32 %v366, %v402
    %v408 = vxor.u32 %v407, 2147483648
    %v409 = vmul.f32 %v408, 1.442695
    %v410 = vpow.pop %v409
    %v411 = vadd.f32 %v410, 1.0
    %v412 = vrcp.pop %v411
    %v413 = vmul.f32 1.0, %v412
    %v414 = vtanh.pop %v407
    %v415 = vmul.f32 %v413, %v274
    %417 = vrot.lane.b32.xlu0 %v414, 64
    %v418 = vpop.permute.xlu0 %417
    %v420 = vmul.f32 %v413, %v418
    %422 = vrot.lane.b32.xlu0 %v420, 32
    %v423 = vpop.permute.xlu0 %422
    %v425 = vadd.f32 %v415, %v423
    %v426 = vtanh.pop %v425
    %428 = vrot.lane.b32.xlu0 %v426, 64
    %v429 = vpop.permute.xlu0 %428
    %v431 = vmul.f32 %v413, %v429
    %v432 = vpack.c.bf16 %v431, %v431
    %434 = vrot.lane.b32.xlu0 %v432, 32
    %v435 = vpop.permute.xlu0 %434
    %v437 = vsel %vm94, %v435, 0
    %439 = vmatprep.subr.bf16.mxu0 0
    %440 = vmatpush1.bf16.msra.mxu0 0
    %441 = vmatprep.subr.bf16.mxu0 0
    %442 = vmatpush1.bf16.msra.mxu0 0
    %443 = vmatprep.subr.bf16.mxu0 0
    %444 = vmatpush1.bf16.msra.mxu0 0
    %445 = vmatprep.subr.bf16.mxu0 0
    %446 = vmatpush1.bf16.msra.mxu0 0
    %447 = vmatprep.subr.bf16.mxu0 0
    %448 = vmatpush1.bf16.msra.mxu0 0
    %449 = vmatprep.subr.bf16.mxu0 0
    %450 = vmatpush1.bf16.msra.mxu0 0
    %451 = vmatprep.subr.bf16.mxu0 %v311
    %452 = vmatpush1.bf16.msra.mxu0 %v310
    %453 = vmatprep.subr.bf16.mxu0 %v309
    %454 = vmatpush1.bf16.msra.mxu0 %v308
    %455 = vmatprep.subr.bf16.mxu0 0
    %456 = vmatpush2.bf16.msra.mxu0 0
    %457 = vmatprep.subr.bf16.mxu0 0
    %458 = vmatpush2.bf16.msra.mxu0 0
    %459 = vmatprep.subr.bf16.mxu0 0
    %460 = vmatpush2.bf16.msra.mxu0 0
    %461 = vmatprep.subr.bf16.mxu0 0
    %462 = vmatpush2.bf16.msra.mxu0 0
    %463 = vmatprep.subr.bf16.mxu0 0
    %464 = vmatpush2.bf16.msra.mxu0 0
    %465 = vmatprep.subr.bf16.mxu0 0
    %466 = vmatpush2.bf16.msra.mxu0 0
    %467 = vmatprep.subr.bf16.mxu0 0
    %468 = vmatpush2.bf16.msra.mxu0 0
    %469 = vmatprep.subr.bf16.mxu0 0
    %470 = vmatpush2.bf16.msra.mxu0 0
    %471 = vmatprep.mubr.bf16.mxu0 0
    %472 = vmatmul.mubr.bf16.gmra.mxu0 %v437
    %v473 = vpop.f32.mrf.mxu0
    %v474 = vadd.f32 %v286, %v473
    %v475 = vpop.f32.mrf.mxu0
    %v476 = vadd.f32 %v290, %v475
    %v477 = vpop.f32.mrf.mxu0
    %v478 = vpop.f32.mrf.mxu0
    %479 = vdwg.mxu0
    %s480 = smul.u32 1, 2
    %s481 = smul.addr %s480, 8
    %s482 = scalar_lea.vmem [#allocation6], %s481
    %483 = vst [vmem:[%s482] sm:$0xff] %v474
    %484 = vst [vmem:[%s482 + $0x8] sm:$0xff] %v476
    %s485 = scalar_lea.vmem [#allocation2], 16
    %v486 = vld [vmem:[%s485] sm:$0xff]
    %487 = vmatprep.subr.bf16.mxu0 0
    %488 = vmatpush1.bf16.msra.mxu0 0
    %489 = vmatprep.subr.bf16.mxu0 0
    %490 = vmatpush1.bf16.msra.mxu0 0
    %491 = vmatprep.subr.bf16.mxu0 0
    %492 = vmatpush1.bf16.msra.mxu0 0
    %493 = vmatprep.subr.bf16.mxu0 0
    %494 = vmatpush1.bf16.msra.mxu0 0
    %495 = vmatprep.subr.bf16.mxu0 0
    %496 = vmatpush1.bf16.msra.mxu0 0
    %497 = vmatprep.subr.bf16.mxu0 0
    %498 = vmatpush1.bf16.msra.mxu0 0
    %499 = vmatprep.subr.bf16.mxu0 0
    %500 = vmatpush1.bf16.msra.mxu0 %v210
    %501 = vmatprep.subr.bf16.mxu0 0
    %502 = vmatpush1.bf16.msra.mxu0 %v209
    %503 = vmatprep.subr.bf16.mxu0 0
    %504 = vmatpush2.bf16.msra.mxu0 0
    %505 = vmatprep.subr.bf16.mxu0 0
    %506 = vmatpush2.bf16.msra.mxu0 0
    %507 = vmatprep.subr.bf16.mxu0 0
    %508 = vmatpush2.bf16.msra.mxu0 0
    %509 = vmatprep.subr.bf16.mxu0 0
    %510 = vmatpush2.bf16.msra.mxu0 0
    %511 = vmatprep.subr.bf16.mxu0 0
    %512 = vmatpush2.bf16.msra.mxu0 0
    %513 = vmatprep.subr.bf16.mxu0 0
    %514 = vmatpush2.bf16.msra.mxu0 0
    %515 = vmatprep.subr.bf16.mxu0 0
    %516 = vmatpush2.bf16.msra.mxu0 0
    %517 = vmatprep.subr.bf16.mxu0 0
    %518 = vmatpush2.bf16.msra.mxu0 0
    %519 = vmatprep.mubr.bf16.mxu0 0
    %520 = vmatmul.mubr.bf16.gmra.mxu0 %v437
    %v521 = vpop.f32.mrf.mxu0
    %v522 = vadd.f32 0.0, %v521
    %v523 = vpop.f32.mrf.mxu0
    %v524 = vpop.f32.mrf.mxu0
    %v525 = vpop.f32.mrf.mxu0
    %526 = vdwg.mxu0
    %v527 = vadd.f32 %v486, %v522
    %v528 = vxor.u32 %v527, 2147483648
    %v529 = vmul.f32 %v528, 1.442695
    %v530 = vpow.pop %v529
    %v531 = vadd.f32 %v530, 1.0
    %v532 = vrcp.pop %v531
    %v533 = vmul.f32 1.0, %v532
    %v534 = vtanh.pop %v527
    %v535 = vmul.f32 %v533, %v425
    %537 = vrot.lane.b32.xlu0 %v534, 64
    %v538 = vpop.permute.xlu0 %537
    %v540 = vmul.f32 %v533, %v538
    %542 = vrot.lane.b32.xlu0 %v540, 32
    %v543 = vpop.permute.xlu0 %542
    %v545 = vadd.f32 %v535, %v543
    %v546 = vtanh.pop %v545
    %548 = vrot.lane.b32.xlu0 %v546, 64
    %v549 = vpop.permute.xlu0 %548
    %v551 = vmul.f32 %v533, %v549
    %v552 = vpack.c.bf16 %v551, %v551
    %554 = vrot.lane.b32.xlu0 %v552, 32
    %v555 = vpop.permute.xlu0 %554
    %v557 = vsel %vm94, %v555, 0
    %559 = vmatprep.subr.bf16.mxu0 0
    %560 = vmatpush1.bf16.msra.mxu0 0
    %561 = vmatprep.subr.bf16.mxu0 0
    %562 = vmatpush1.bf16.msra.mxu0 0
    %563 = vmatprep.subr.bf16.mxu0 0
    %564 = vmatpush1.bf16.msra.mxu0 0
    %565 = vmatprep.subr.bf16.mxu0 0
    %566 = vmatpush1.bf16.msra.mxu0 0
    %567 = vmatprep.subr.bf16.mxu0 0
    %568 = vmatpush1.bf16.msra.mxu0 0
    %569 = vmatprep.subr.bf16.mxu0 0
    %570 = vmatpush1.bf16.msra.mxu0 0
    %571 = vmatprep.subr.bf16.mxu0 %v311
    %572 = vmatpush1.bf16.msra.mxu0 %v310
    %573 = vmatprep.subr.bf16.mxu0 %v309
    %574 = vmatpush1.bf16.msra.mxu0 %v308
    %575 = vmatprep.subr.bf16.mxu0 0
    %576 = vmatpush2.bf16.msra.mxu0 0
    %577 = vmatprep.subr.bf16.mxu0 0
    %578 = vmatpush2.bf16.msra.mxu0 0
    %579 = vmatprep.subr.bf16.mxu0 0
    %580 = vmatpush2.bf16.msra.mxu0 0
    %581 = vmatprep.subr.bf16.mxu0 0
    %582 = vmatpush2.bf16.msra.mxu0 0
    %583 = vmatprep.subr.bf16.mxu0 0
    %584 = vmatpush2.bf16.msra.mxu0 0
    %585 = vmatprep.subr.bf16.mxu0 0
    %586 = vmatpush2.bf16.msra.mxu0 0
    %587 = vmatprep.subr.bf16.mxu0 0
    %588 = vmatpush2.bf16.msra.mxu0 0
    %589 = vmatprep.subr.bf16.mxu0 0
    %590 = vmatpush2.bf16.msra.mxu0 0
    %591 = vmatprep.mubr.bf16.mxu0 0
    %592 = vmatmul.mubr.bf16.gmra.mxu0 %v557
    %v593 = vpop.f32.mrf.mxu0
    %v594 = vadd.f32 %v286, %v593
    %v595 = vpop.f32.mrf.mxu0
    %v596 = vadd.f32 %v290, %v595
    %v597 = vpop.f32.mrf.mxu0
    %v598 = vpop.f32.mrf.mxu0
    %599 = vdwg.mxu0
    %s600 = smul.u32 2, 2
    %s601 = smul.addr %s600, 8
    %s602 = scalar_lea.vmem [#allocation6], %s601
    %603 = vst [vmem:[%s602] sm:$0xff] %v594
    %604 = vst [vmem:[%s602 + $0x8] sm:$0xff] %v596
    %s605 = scalar_lea.vmem [#allocation2], 24
    %v606 = vld [vmem:[%s605] sm:$0xff]
    %607 = vmatprep.subr.bf16.mxu0 0
    %608 = vmatpush1.bf16.msra.mxu0 0
    %609 = vmatprep.subr.bf16.mxu0 0
    %610 = vmatpush1.bf16.msra.mxu0 0
    %611 = vmatprep.subr.bf16.mxu0 0
    %612 = vmatpush1.bf16.msra.mxu0 0
    %613 = vmatprep.subr.bf16.mxu0 0
    %614 = vmatpush1.bf16.msra.mxu0 0
    %615 = vmatprep.subr.bf16.mxu0 0
    %616 = vmatpush1.bf16.msra.mxu0 0
    %617 = vmatprep.subr.bf16.mxu0 0
    %618 = vmatpush1.bf16.msra.mxu0 0
    %619 = vmatprep.subr.bf16.mxu0 0
    %620 = vmatpush1.bf16.msra.mxu0 %v210
    %621 = vmatprep.subr.bf16.mxu0 0
    %622 = vmatpush1.bf16.msra.mxu0 %v209
    %623 = vmatprep.subr.bf16.mxu0 0
    %624 = vmatpush2.bf16.msra.mxu0 0
    %625 = vmatprep.subr.bf16.mxu0 0
    %626 = vmatpush2.bf16.msra.mxu0 0
    %627 = vmatprep.subr.bf16.mxu0 0
    %628 = vmatpush2.bf16.msra.mxu0 0
    %629 = vmatprep.subr.bf16.mxu0 0
    %630 = vmatpush2.bf16.msra.mxu0 0
    %631 = vmatprep.subr.bf16.mxu0 0
    %632 = vmatpush2.bf16.msra.mxu0 0
    %633 = vmatprep.subr.bf16.mxu0 0
    %634 = vmatpush2.bf16.msra.mxu0 0
    %635 = vmatprep.subr.bf16.mxu0 0
    %636 = vmatpush2.bf16.msra.mxu0 0
    %637 = vmatprep.subr.bf16.mxu0 0
    %638 = vmatpush2.bf16.msra.mxu0 0
    %639 = vmatprep.mubr.bf16.mxu0 0
    %640 = vmatmul.mubr.bf16.gmra.mxu0 %v557
    %v641 = vpop.f32.mrf.mxu0
    %v642 = vadd.f32 0.0, %v641
    %v643 = vpop.f32.mrf.mxu0
    %v644 = vpop.f32.mrf.mxu0
    %v645 = vpop.f32.mrf.mxu0
    %646 = vdwg.mxu0
    %v647 = vadd.f32 %v606, %v642
    %v648 = vxor.u32 %v647, 2147483648
    %v649 = vmul.f32 %v648, 1.442695
    %v650 = vpow.pop %v649
    %v651 = vadd.f32 %v650, 1.0
    %v652 = vrcp.pop %v651
    %v653 = vmul.f32 1.0, %v652
    %v654 = vtanh.pop %v647
    %v655 = vmul.f32 %v653, %v545
    %657 = vrot.lane.b32.xlu0 %v654, 64
    %v658 = vpop.permute.xlu0 %657
    %v660 = vmul.f32 %v653, %v658
    %662 = vrot.lane.b32.xlu0 %v660, 32
    %v663 = vpop.permute.xlu0 %662
    %v665 = vadd.f32 %v655, %v663
    %v666 = vtanh.pop %v665
    %668 = vrot.lane.b32.xlu0 %v666, 64
    %v669 = vpop.permute.xlu0 %668
    %v671 = vmul.f32 %v653, %v669
    %v672 = vpack.c.bf16 %v671, %v671
    %674 = vrot.lane.b32.xlu0 %v672, 32
    %v675 = vpop.permute.xlu0 %674
    %v677 = vsel %vm94, %v675, 0
    %679 = vmatprep.subr.bf16.mxu0 0
    %680 = vmatpush1.bf16.msra.mxu0 0
    %681 = vmatprep.subr.bf16.mxu0 0
    %682 = vmatpush1.bf16.msra.mxu0 0
    %683 = vmatprep.subr.bf16.mxu0 0
    %684 = vmatpush1.bf16.msra.mxu0 0
    %685 = vmatprep.subr.bf16.mxu0 0
    %686 = vmatpush1.bf16.msra.mxu0 0
    %687 = vmatprep.subr.bf16.mxu0 0
    %688 = vmatpush1.bf16.msra.mxu0 0
    %689 = vmatprep.subr.bf16.mxu0 0
    %690 = vmatpush1.bf16.msra.mxu0 0
    %691 = vmatprep.subr.bf16.mxu0 %v311
    %692 = vmatpush1.bf16.msra.mxu0 %v310
    %693 = vmatprep.subr.bf16.mxu0 %v309
    %694 = vmatpush1.bf16.msra.mxu0 %v308
    %695 = vmatprep.subr.bf16.mxu0 0
    %696 = vmatpush2.bf16.msra.mxu0 0
    %697 = vmatprep.subr.bf16.mxu0 0
    %698 = vmatpush2.bf16.msra.mxu0 0
    %699 = vmatprep.subr.bf16.mxu0 0
    %700 = vmatpush2.bf16.msra.mxu0 0
    %701 = vmatprep.subr.bf16.mxu0 0
    %702 = vmatpush2.bf16.msra.mxu0 0
    %703 = vmatprep.subr.bf16.mxu0 0
    %704 = vmatpush2.bf16.msra.mxu0 0
    %705 = vmatprep.subr.bf16.mxu0 0
    %706 = vmatpush2.bf16.msra.mxu0 0
    %707 = vmatprep.subr.bf16.mxu0 0
    %708 = vmatpush2.bf16.msra.mxu0 0
    %709 = vmatprep.subr.bf16.mxu0 0
    %710 = vmatpush2.bf16.msra.mxu0 0
    %711 = vmatprep.mubr.bf16.mxu0 0
    %712 = vmatmul.mubr.bf16.gmra.mxu0 %v677
    %v713 = vpop.f32.mrf.mxu0
    %v714 = vadd.f32 %v286, %v713
    %v715 = vpop.f32.mrf.mxu0
    %v716 = vadd.f32 %v290, %v715
    %v717 = vpop.f32.mrf.mxu0
    %v718 = vpop.f32.mrf.mxu0
    %719 = vdwg.mxu0
    %s720 = smul.u32 3, 2
    %s721 = smul.addr %s720, 8
    %s722 = scalar_lea.vmem [#allocation6], %s721
    %723 = vst [vmem:[%s722] sm:$0xff] %v714
    %724 = vst [vmem:[%s722 + $0x8] sm:$0xff] %v716
    %s725 = scalar_lea.vmem [#allocation2], 32
    %v726 = vld [vmem:[%s725] sm:$0xff]
    %727 = vmatprep.subr.bf16.mxu0 0
    %728 = vmatpush1.bf16.msra.mxu0 0
    %729 = vmatprep.subr.bf16.mxu0 0
    %730 = vmatpush1.bf16.msra.mxu0 0
    %731 = vmatprep.subr.bf16.mxu0 0
    %732 = vmatpush1.bf16.msra.mxu0 0
    %733 = vmatprep.subr.bf16.mxu0 0
    %734 = vmatpush1.bf16.msra.mxu0 0
    %735 = vmatprep.subr.bf16.mxu0 0
    %736 = vmatpush1.bf16.msra.mxu0 0
    %737 = vmatprep.subr.bf16.mxu0 0
    %738 = vmatpush1.bf16.msra.mxu0 0
    %739 = vmatprep.subr.bf16.mxu0 0
    %740 = vmatpush1.bf16.msra.mxu0 %v210
    %741 = vmatprep.subr.bf16.mxu0 0
    %742 = vmatpush1.bf16.msra.mxu0 %v209
    %743 = vmatprep.subr.bf16.mxu0 0
    %744 = vmatpush2.bf16.msra.mxu0 0
    %745 = vmatprep.subr.bf16.mxu0 0
    %746 = vmatpush2.bf16.msra.mxu0 0
    %747 = vmatprep.subr.bf16.mxu0 0
    %748 = vmatpush2.bf16.msra.mxu0 0
    %749 = vmatprep.subr.bf16.mxu0 0
    %750 = vmatpush2.bf16.msra.mxu0 0
    %751 = vmatprep.subr.bf16.mxu0 0
    %752 = vmatpush2.bf16.msra.mxu0 0
    %753 = vmatprep.subr.bf16.mxu0 0
    %754 = vmatpush2.bf16.msra.mxu0 0
    %755 = vmatprep.subr.bf16.mxu0 0
    %756 = vmatpush2.bf16.msra.mxu0 0
    %757 = vmatprep.subr.bf16.mxu0 0
    %758 = vmatpush2.bf16.msra.mxu0 0
    %759 = vmatprep.mubr.bf16.mxu0 0
    %760 = vmatmul.mubr.bf16.gmra.mxu0 %v677
    %v761 = vpop.f32.mrf.mxu0
    %v762 = vadd.f32 0.0, %v761
    %v763 = vpop.f32.mrf.mxu0
    %v764 = vpop.f32.mrf.mxu0
    %v765 = vpop.f32.mrf.mxu0
    %766 = vdwg.mxu0
    %v767 = vadd.f32 %v726, %v762
    %v768 = vxor.u32 %v767, 2147483648
    %v769 = vmul.f32 %v768, 1.442695
    %v770 = vpow.pop %v769
    %v771 = vadd.f32 %v770, 1.0
    %v772 = vrcp.pop %v771
    %v773 = vmul.f32 1.0, %v772
    %v774 = vtanh.pop %v767
    %v775 = vmul.f32 %v773, %v665
    %777 = vrot.lane.b32.xlu0 %v774, 64
    %v778 = vpop.permute.xlu0 %777
    %v780 = vmul.f32 %v773, %v778
    %782 = vrot.lane.b32.xlu0 %v780, 32
    %v783 = vpop.permute.xlu0 %782
    %v785 = vadd.f32 %v775, %v783
    %v786 = vtanh.pop %v785
    %788 = vrot.lane.b32.xlu0 %v786, 64
    %v789 = vpop.permute.xlu0 %788
    %v791 = vmul.f32 %v773, %v789
    %v792 = vpack.c.bf16 %v791, %v791
    %794 = vrot.lane.b32.xlu0 %v792, 32
    %v795 = vpop.permute.xlu0 %794
    %v797 = vsel %vm94, %v795, 0
    %799 = vmatprep.subr.bf16.mxu0 0
    %800 = vmatpush1.bf16.msra.mxu0 0
    %801 = vmatprep.subr.bf16.mxu0 0
    %802 = vmatpush1.bf16.msra.mxu0 0
    %803 = vmatprep.subr.bf16.mxu0 0
    %804 = vmatpush1.bf16.msra.mxu0 0
    %805 = vmatprep.subr.bf16.mxu0 0
    %806 = vmatpush1.bf16.msra.mxu0 0
    %807 = vmatprep.subr.bf16.mxu0 0
    %808 = vmatpush1.bf16.msra.mxu0 0
    %809 = vmatprep.subr.bf16.mxu0 0
    %810 = vmatpush1.bf16.msra.mxu0 0
    %811 = vmatprep.subr.bf16.mxu0 %v311
    %812 = vmatpush1.bf16.msra.mxu0 %v310
    %813 = vmatprep.subr.bf16.mxu0 %v309
    %814 = vmatpush1.bf16.msra.mxu0 %v308
    %815 = vmatprep.subr.bf16.mxu0 0
    %816 = vmatpush2.bf16.msra.mxu0 0
    %817 = vmatprep.subr.bf16.mxu0 0
    %818 = vmatpush2.bf16.msra.mxu0 0
    %819 = vmatprep.subr.bf16.mxu0 0
    %820 = vmatpush2.bf16.msra.mxu0 0
    %821 = vmatprep.subr.bf16.mxu0 0
    %822 = vmatpush2.bf16.msra.mxu0 0
    %823 = vmatprep.subr.bf16.mxu0 0
    %824 = vmatpush2.bf16.msra.mxu0 0
    %825 = vmatprep.subr.bf16.mxu0 0
    %826 = vmatpush2.bf16.msra.mxu0 0
    %827 = vmatprep.subr.bf16.mxu0 0
    %828 = vmatpush2.bf16.msra.mxu0 0
    %829 = vmatprep.subr.bf16.mxu0 0
    %830 = vmatpush2.bf16.msra.mxu0 0
    %831 = vmatprep.mubr.bf16.mxu0 0
    %832 = vmatmul.mubr.bf16.gmra.mxu0 %v797
    %v833 = vpop.f32.mrf.mxu0
    %v834 = vadd.f32 %v286, %v833
    %v835 = vpop.f32.mrf.mxu0
    %v836 = vadd.f32 %v290, %v835
    %v837 = vpop.f32.mrf.mxu0
    %v838 = vpop.f32.mrf.mxu0
    %839 = vdwg.mxu0
    %s840 = smul.u32 4, 2
    %s841 = smul.addr %s840, 8
    %s842 = scalar_lea.vmem [#allocation6], %s841
    %843 = vst [vmem:[%s842] sm:$0xff] %v834
    %844 = vst [vmem:[%s842 + $0x8] sm:$0xff] %v836
    %s845 = scalar_lea.vmem [#allocation2], 40
    %v846 = vld [vmem:[%s845] sm:$0xff]
    %847 = vmatprep.subr.bf16.mxu0 0
    %848 = vmatpush1.bf16.msra.mxu0 0
    %849 = vmatprep.subr.bf16.mxu0 0
    %850 = vmatpush1.bf16.msra.mxu0 0
    %851 = vmatprep.subr.bf16.mxu0 0
    %852 = vmatpush1.bf16.msra.mxu0 0
    %853 = vmatprep.subr.bf16.mxu0 0
    %854 = vmatpush1.bf16.msra.mxu0 0
    %855 = vmatprep.subr.bf16.mxu0 0
    %856 = vmatpush1.bf16.msra.mxu0 0
    %857 = vmatprep.subr.bf16.mxu0 0
    %858 = vmatpush1.bf16.msra.mxu0 0
    %859 = vmatprep.subr.bf16.mxu0 0
    %860 = vmatpush1.bf16.msra.mxu0 %v210
    %861 = vmatprep.subr.bf16.mxu0 0
    %862 = vmatpush1.bf16.msra.mxu0 %v209
    %863 = vmatprep.subr.bf16.mxu0 0
    %864 = vmatpush2.bf16.msra.mxu0 0
    %865 = vmatprep.subr.bf16.mxu0 0
    %866 = vmatpush2.bf16.msra.mxu0 0
    %867 = vmatprep.subr.bf16.mxu0 0
    %868 = vmatpush2.bf16.msra.mxu0 0
    %869 = vmatprep.subr.bf16.mxu0 0
    %870 = vmatpush2.bf16.msra.mxu0 0
    %871 = vmatprep.subr.bf16.mxu0 0
    %872 = vmatpush2.bf16.msra.mxu0 0
    %873 = vmatprep.subr.bf16.mxu0 0
    %874 = vmatpush2.bf16.msra.mxu0 0
    %875 = vmatprep.subr.bf16.mxu0 0
    %876 = vmatpush2.bf16.msra.mxu0 0
    %877 = vmatprep.subr.bf16.mxu0 0
    %878 = vmatpush2.bf16.msra.mxu0 0
    %879 = vmatprep.mubr.bf16.mxu0 0
    %880 = vmatmul.mubr.bf16.gmra.mxu0 %v797
    %v881 = vpop.f32.mrf.mxu0
    %v882 = vadd.f32 0.0, %v881
    %v883 = vpop.f32.mrf.mxu0
    %v884 = vpop.f32.mrf.mxu0
    %v885 = vpop.f32.mrf.mxu0
    %886 = vdwg.mxu0
    %v887 = vadd.f32 %v846, %v882
    %v888 = vxor.u32 %v887, 2147483648
    %v889 = vmul.f32 %v888, 1.442695
    %v890 = vpow.pop %v889
    %v891 = vadd.f32 %v890, 1.0
    %v892 = vrcp.pop %v891
    %v893 = vmul.f32 1.0, %v892
    %v894 = vtanh.pop %v887
    %v895 = vmul.f32 %v893, %v785
    %897 = vrot.lane.b32.xlu0 %v894, 64
    %v898 = vpop.permute.xlu0 %897
    %v900 = vmul.f32 %v893, %v898
    %902 = vrot.lane.b32.xlu0 %v900, 32
    %v903 = vpop.permute.xlu0 %902
    %v905 = vadd.f32 %v895, %v903
    %v906 = vtanh.pop %v905
    %908 = vrot.lane.b32.xlu0 %v906, 64
    %v909 = vpop.permute.xlu0 %908
    %v911 = vmul.f32 %v893, %v909
    %v912 = vpack.c.bf16 %v911, %v911
    %914 = vrot.lane.b32.xlu0 %v912, 32
    %v915 = vpop.permute.xlu0 %914
    %v917 = vsel %vm94, %v915, 0
    %919 = vmatprep.subr.bf16.mxu0 0
    %920 = vmatpush1.bf16.msra.mxu0 0
    %921 = vmatprep.subr.bf16.mxu0 0
    %922 = vmatpush1.bf16.msra.mxu0 0
    %923 = vmatprep.subr.bf16.mxu0 0
    %924 = vmatpush1.bf16.msra.mxu0 0
    %925 = vmatprep.subr.bf16.mxu0 0
    %926 = vmatpush1.bf16.msra.mxu0 0
    %927 = vmatprep.subr.bf16.mxu0 0
    %928 = vmatpush1.bf16.msra.mxu0 0
    %929 = vmatprep.subr.bf16.mxu0 0
    %930 = vmatpush1.bf16.msra.mxu0 0
    %931 = vmatprep.subr.bf16.mxu0 %v311
    %932 = vmatpush1.bf16.msra.mxu0 %v310
    %933 = vmatprep.subr.bf16.mxu0 %v309
    %934 = vmatpush1.bf16.msra.mxu0 %v308
    %935 = vmatprep.subr.bf16.mxu0 0
    %936 = vmatpush2.bf16.msra.mxu0 0
    %937 = vmatprep.subr.bf16.mxu0 0
    %938 = vmatpush2.bf16.msra.mxu0 0
    %939 = vmatprep.subr.bf16.mxu0 0
    %940 = vmatpush2.bf16.msra.mxu0 0
    %941 = vmatprep.subr.bf16.mxu0 0
    %942 = vmatpush2.bf16.msra.mxu0 0
    %943 = vmatprep.subr.bf16.mxu0 0
    %944 = vmatpush2.bf16.msra.mxu0 0
    %945 = vmatprep.subr.bf16.mxu0 0
    %946 = vmatpush2.bf16.msra.mxu0 0
    %947 = vmatprep.subr.bf16.mxu0 0
    %948 = vmatpush2.bf16.msra.mxu0 0
    %949 = vmatprep.subr.bf16.mxu0 0
    %950 = vmatpush2.bf16.msra.mxu0 0
    %951 = vmatprep.mubr.bf16.mxu0 0
    %952 = vmatmul.mubr.bf16.gmra.mxu0 %v917
    %v953 = vpop.f32.mrf.mxu0
    %v954 = vadd.f32 %v286, %v953
    %v955 = vpop.f32.mrf.mxu0
    %v956 = vadd.f32 %v290, %v955
    %v957 = vpop.f32.mrf.mxu0
    %v958 = vpop.f32.mrf.mxu0
    %959 = vdwg.mxu0
    %s960 = smul.u32 5, 2
    %s961 = smul.addr %s960, 8
    %s962 = scalar_lea.vmem [#allocation6], %s961
    %963 = vst [vmem:[%s962] sm:$0xff] %v954
    %964 = vst [vmem:[%s962 + $0x8] sm:$0xff] %v956
    %s965 = scalar_lea.vmem [#allocation2], 48
    %v966 = vld [vmem:[%s965] sm:$0xff]
    %967 = vmatprep.subr.bf16.mxu0 0
    %968 = vmatpush1.bf16.msra.mxu0 0
    %969 = vmatprep.subr.bf16.mxu0 0
    %970 = vmatpush1.bf16.msra.mxu0 0
    %971 = vmatprep.subr.bf16.mxu0 0
    %972 = vmatpush1.bf16.msra.mxu0 0
    %973 = vmatprep.subr.bf16.mxu0 0
    %974 = vmatpush1.bf16.msra.mxu0 0
    %975 = vmatprep.subr.bf16.mxu0 0
    %976 = vmatpush1.bf16.msra.mxu0 0
    %977 = vmatprep.subr.bf16.mxu0 0
    %978 = vmatpush1.bf16.msra.mxu0 0
    %979 = vmatprep.subr.bf16.mxu0 0
    %980 = vmatpush1.bf16.msra.mxu0 %v210
    %981 = vmatprep.subr.bf16.mxu0 0
    %982 = vmatpush1.bf16.msra.mxu0 %v209
    %983 = vmatprep.subr.bf16.mxu0 0
    %984 = vmatpush2.bf16.msra.mxu0 0
    %985 = vmatprep.subr.bf16.mxu0 0
    %986 = vmatpush2.bf16.msra.mxu0 0
    %987 = vmatprep.subr.bf16.mxu0 0
    %988 = vmatpush2.bf16.msra.mxu0 0
    %989 = vmatprep.subr.bf16.mxu0 0
    %990 = vmatpush2.bf16.msra.mxu0 0
    %991 = vmatprep.subr.bf16.mxu0 0
    %992 = vmatpush2.bf16.msra.mxu0 0
    %993 = vmatprep.subr.bf16.mxu0 0
    %994 = vmatpush2.bf16.msra.mxu0 0
    %995 = vmatprep.subr.bf16.mxu0 0
    %996 = vmatpush2.bf16.msra.mxu0 0
    %997 = vmatprep.subr.bf16.mxu0 0
    %998 = vmatpush2.bf16.msra.mxu0 0
    %999 = vmatprep.mubr.bf16.mxu0 0
    %1000 = vmatmul.mubr.bf16.gmra.mxu0 %v917
    %v1001 = vpop.f32.mrf.mxu0
    %v1002 = vadd.f32 0.0, %v1001
    %v1003 = vpop.f32.mrf.mxu0
    %v1004 = vpop.f32.mrf.mxu0
    %v1005 = vpop.f32.mrf.mxu0
    %1006 = vdwg.mxu0
    %v1007 = vadd.f32 %v966, %v1002
    %v1008 = vxor.u32 %v1007, 2147483648
    %v1009 = vmul.f32 %v1008, 1.442695
    %v1010 = vpow.pop %v1009
    %v1011 = vadd.f32 %v1010, 1.0
    %v1012 = vrcp.pop %v1011
    %v1013 = vmul.f32 1.0, %v1012
    %v1014 = vtanh.pop %v1007
    %v1015 = vmul.f32 %v1013, %v905
    %1017 = vrot.lane.b32.xlu0 %v1014, 64
    %v1018 = vpop.permute.xlu0 %1017
    %v1020 = vmul.f32 %v1013, %v1018
    %1022 = vrot.lane.b32.xlu0 %v1020, 32
    %v1023 = vpop.permute.xlu0 %1022
    %v1025 = vadd.f32 %v1015, %v1023
    %v1026 = vtanh.pop %v1025
    %1028 = vrot.lane.b32.xlu0 %v1026, 64
    %v1029 = vpop.permute.xlu0 %1028
    %v1031 = vmul.f32 %v1013, %v1029
    %v1032 = vpack.c.bf16 %v1031, %v1031
    %1034 = vrot.lane.b32.xlu0 %v1032, 32
    %v1035 = vpop.permute.xlu0 %1034
    %v1037 = vsel %vm94, %v1035, 0
    %1039 = vmatprep.subr.bf16.mxu0 0
    %1040 = vmatpush1.bf16.msra.mxu0 0
    %1041 = vmatprep.subr.bf16.mxu0 0
    %1042 = vmatpush1.bf16.msra.mxu0 0
    %1043 = vmatprep.subr.bf16.mxu0 0
    %1044 = vmatpush1.bf16.msra.mxu0 0
    %1045 = vmatprep.subr.bf16.mxu0 0
    %1046 = vmatpush1.bf16.msra.mxu0 0
    %1047 = vmatprep.subr.bf16.mxu0 0
    %1048 = vmatpush1.bf16.msra.mxu0 0
    %1049 = vmatprep.subr.bf16.mxu0 0
    %1050 = vmatpush1.bf16.msra.mxu0 0
    %1051 = vmatprep.subr.bf16.mxu0 %v311
    %1052 = vmatpush1.bf16.msra.mxu0 %v310
    %1053 = vmatprep.subr.bf16.mxu0 %v309
    %1054 = vmatpush1.bf16.msra.mxu0 %v308
    %1055 = vmatprep.subr.bf16.mxu0 0
    %1056 = vmatpush2.bf16.msra.mxu0 0
    %1057 = vmatprep.subr.bf16.mxu0 0
    %1058 = vmatpush2.bf16.msra.mxu0 0
    %1059 = vmatprep.subr.bf16.mxu0 0
    %1060 = vmatpush2.bf16.msra.mxu0 0
    %1061 = vmatprep.subr.bf16.mxu0 0
    %1062 = vmatpush2.bf16.msra.mxu0 0
    %1063 = vmatprep.subr.bf16.mxu0 0
    %1064 = vmatpush2.bf16.msra.mxu0 0
    %1065 = vmatprep.subr.bf16.mxu0 0
    %1066 = vmatpush2.bf16.msra.mxu0 0
    %1067 = vmatprep.subr.bf16.mxu0 0
    %1068 = vmatpush2.bf16.msra.mxu0 0
    %1069 = vmatprep.subr.bf16.mxu0 0
    %1070 = vmatpush2.bf16.msra.mxu0 0
    %1071 = vmatprep.mubr.bf16.mxu0 0
    %1072 = vmatmul.mubr.bf16.gmra.mxu0 %v1037
    %v1073 = vpop.f32.mrf.mxu0
    %v1074 = vadd.f32 %v286, %v1073
    %v1075 = vpop.f32.mrf.mxu0
    %v1076 = vadd.f32 %v290, %v1075
    %v1077 = vpop.f32.mrf.mxu0
    %v1078 = vpop.f32.mrf.mxu0
    %1079 = vdwg.mxu0
    %s1080 = smul.u32 6, 2
    %s1081 = smul.addr %s1080, 8
    %s1082 = scalar_lea.vmem [#allocation6], %s1081
    %1083 = vst [vmem:[%s1082] sm:$0xff] %v1074
    %1084 = vst [vmem:[%s1082 + $0x8] sm:$0xff] %v1076
    %s1085 = scalar_lea.vmem [#allocation2], 56
    %v1086 = vld [vmem:[%s1085] sm:$0xff]
    %1087 = vmatprep.subr.bf16.mxu0 0
    %1088 = vmatpush1.bf16.msra.mxu0 0
    %1089 = vmatprep.subr.bf16.mxu0 0
    %1090 = vmatpush1.bf16.msra.mxu0 0
    %1091 = vmatprep.subr.bf16.mxu0 0
    %1092 = vmatpush1.bf16.msra.mxu0 0
    %1093 = vmatprep.subr.bf16.mxu0 0
    %1094 = vmatpush1.bf16.msra.mxu0 0
    %1095 = vmatprep.subr.bf16.mxu0 0
    %1096 = vmatpush1.bf16.msra.mxu0 0
    %1097 = vmatprep.subr.bf16.mxu0 0
    %1098 = vmatpush1.bf16.msra.mxu0 0
    %1099 = vmatprep.subr.bf16.mxu0 0
    %1100 = vmatpush1.bf16.msra.mxu0 %v210
    %1101 = vmatprep.subr.bf16.mxu0 0
    %1102 = vmatpush1.bf16.msra.mxu0 %v209
    %1103 = vmatprep.subr.bf16.mxu0 0
    %1104 = vmatpush2.bf16.msra.mxu0 0
    %1105 = vmatprep.subr.bf16.mxu0 0
    %1106 = vmatpush2.bf16.msra.mxu0 0
    %1107 = vmatprep.subr.bf16.mxu0 0
    %1108 = vmatpush2.bf16.msra.mxu0 0
    %1109 = vmatprep.subr.bf16.mxu0 0
    %1110 = vmatpush2.bf16.msra.mxu0 0
    %1111 = vmatprep.subr.bf16.mxu0 0
    %1112 = vmatpush2.bf16.msra.mxu0 0
    %1113 = vmatprep.subr.bf16.mxu0 0
    %1114 = vmatpush2.bf16.msra.mxu0 0
    %1115 = vmatprep.subr.bf16.mxu0 0
    %1116 = vmatpush2.bf16.msra.mxu0 0
    %1117 = vmatprep.subr.bf16.mxu0 0
    %1118 = vmatpush2.bf16.msra.mxu0 0
    %1119 = vmatprep.mubr.bf16.mxu0 0
    %1120 = vmatmul.mubr.bf16.gmra.mxu0 %v1037
    %v1121 = vpop.f32.mrf.mxu0
    %v1122 = vadd.f32 0.0, %v1121
    %v1123 = vpop.f32.mrf.mxu0
    %v1124 = vpop.f32.mrf.mxu0
    %v1125 = vpop.f32.mrf.mxu0
    %1126 = vdwg.mxu0
    %v1127 = vadd.f32 %v1086, %v1122
    %v1128 = vxor.u32 %v1127, 2147483648
    %v1129 = vmul.f32 %v1128, 1.442695
    %v1130 = vpow.pop %v1129
    %v1131 = vadd.f32 %v1130, 1.0
    %v1132 = vrcp.pop %v1131
    %v1133 = vmul.f32 1.0, %v1132
    %v1134 = vtanh.pop %v1127
    %v1135 = vmul.f32 %v1133, %v1025
    %1137 = vrot.lane.b32.xlu0 %v1134, 64
    %v1138 = vpop.permute.xlu0 %1137
    %v1140 = vmul.f32 %v1133, %v1138
    %1142 = vrot.lane.b32.xlu0 %v1140, 32
    %v1143 = vpop.permute.xlu0 %1142
    %v1145 = vadd.f32 %v1135, %v1143
    %v1146 = vtanh.pop %v1145
    %1148 = vrot.lane.b32.xlu0 %v1146, 64
    %v1149 = vpop.permute.xlu0 %1148
    %v1151 = vmul.f32 %v1133, %v1149
    %v1152 = vpack.c.bf16 %v1151, %v1151
    %1154 = vrot.lane.b32.xlu0 %v1152, 32
    %v1155 = vpop.permute.xlu0 %1154
    %v1157 = vsel %vm94, %v1155, 0
    %1159 = vmatprep.subr.bf16.mxu0 0
    %1160 = vmatpush1.bf16.msra.mxu0 0
    %1161 = vmatprep.subr.bf16.mxu0 0
    %1162 = vmatpush1.bf16.msra.mxu0 0
    %1163 = vmatprep.subr.bf16.mxu0 0
    %1164 = vmatpush1.bf16.msra.mxu0 0
    %1165 = vmatprep.subr.bf16.mxu0 0
    %1166 = vmatpush1.bf16.msra.mxu0 0
    %1167 = vmatprep.subr.bf16.mxu0 0
    %1168 = vmatpush1.bf16.msra.mxu0 0
    %1169 = vmatprep.subr.bf16.mxu0 0
    %1170 = vmatpush1.bf16.msra.mxu0 0
    %1171 = vmatprep.subr.bf16.mxu0 %v311
    %1172 = vmatpush1.bf16.msra.mxu0 %v310
    %1173 = vmatprep.subr.bf16.mxu0 %v309
    %1174 = vmatpush1.bf16.msra.mxu0 %v308
    %1175 = vmatprep.subr.bf16.mxu0 0
    %1176 = vmatpush2.bf16.msra.mxu0 0
    %1177 = vmatprep.subr.bf16.mxu0 0
    %1178 = vmatpush2.bf16.msra.mxu0 0
    %1179 = vmatprep.subr.bf16.mxu0 0
    %1180 = vmatpush2.bf16.msra.mxu0 0
    %1181 = vmatprep.subr.bf16.mxu0 0
    %1182 = vmatpush2.bf16.msra.mxu0 0
    %1183 = vmatprep.subr.bf16.mxu0 0
    %1184 = vmatpush2.bf16.msra.mxu0 0
    %1185 = vmatprep.subr.bf16.mxu0 0
    %1186 = vmatpush2.bf16.msra.mxu0 0
    %1187 = vmatprep.subr.bf16.mxu0 0
    %1188 = vmatpush2.bf16.msra.mxu0 0
    %1189 = vmatprep.subr.bf16.mxu0 0
    %1190 = vmatpush2.bf16.msra.mxu0 0
    %1191 = vmatprep.mubr.bf16.mxu0 0
    %1192 = vmatmul.mubr.bf16.gmra.mxu0 %v1157
    %v1193 = vpop.f32.mrf.mxu0
    %v1194 = vadd.f32 %v286, %v1193
    %v1195 = vpop.f32.mrf.mxu0
    %v1196 = vadd.f32 %v290, %v1195
    %v1197 = vpop.f32.mrf.mxu0
    %v1198 = vpop.f32.mrf.mxu0
    %1199 = vdwg.mxu0
    %s1200 = smul.u32 7, 2
    %s1201 = smul.addr %s1200, 8
    %s1202 = scalar_lea.vmem [#allocation6], %s1201
    %1203 = vst [vmem:[%s1202] sm:$0xff] %v1194
    %1204 = vst [vmem:[%s1202 + $0x8] sm:$0xff] %v1196
    %s1205 = scalar_lea.vmem [#allocation2], 64
    %v1206 = vld [vmem:[%s1205] sm:$0xff]
    %1207 = vmatprep.subr.bf16.mxu0 0
    %1208 = vmatpush1.bf16.msra.mxu0 0
    %1209 = vmatprep.subr.bf16.mxu0 0
    %1210 = vmatpush1.bf16.msra.mxu0 0
    %1211 = vmatprep.subr.bf16.mxu0 0
    %1212 = vmatpush1.bf16.msra.mxu0 0
    %1213 = vmatprep.subr.bf16.mxu0 0
    %1214 = vmatpush1.bf16.msra.mxu0 0
    %1215 = vmatprep.subr.bf16.mxu0 0
    %1216 = vmatpush1.bf16.msra.mxu0 0
    %1217 = vmatprep.subr.bf16.mxu0 0
    %1218 = vmatpush1.bf16.msra.mxu0 0
    %1219 = vmatprep.subr.bf16.mxu0 0
    %1220 = vmatpush1.bf16.msra.mxu0 %v210
    %1221 = vmatprep.subr.bf16.mxu0 0
    %1222 = vmatpush1.bf16.msra.mxu0 %v209
    %1223 = vmatprep.subr.bf16.mxu0 0
    %1224 = vmatpush2.bf16.msra.mxu0 0
    %1225 = vmatprep.subr.bf16.mxu0 0
    %1226 = vmatpush2.bf16.msra.mxu0 0
    %1227 = vmatprep.subr.bf16.mxu0 0
    %1228 = vmatpush2.bf16.msra.mxu0 0
    %1229 = vmatprep.subr.bf16.mxu0 0
    %1230 = vmatpush2.bf16.msra.mxu0 0
    %1231 = vmatprep.subr.bf16.mxu0 0
    %1232 = vmatpush2.bf16.msra.mxu0 0
    %1233 = vmatprep.subr.bf16.mxu0 0
    %1234 = vmatpush2.bf16.msra.mxu0 0
    %1235 = vmatprep.subr.bf16.mxu0 0
    %1236 = vmatpush2.bf16.msra.mxu0 0
    %1237 = vmatprep.subr.bf16.mxu0 0
    %1238 = vmatpush2.bf16.msra.mxu0 0
    %1239 = vmatprep.mubr.bf16.mxu0 0
    %1240 = vmatmul.mubr.bf16.gmra.mxu0 %v1157
    %v1241 = vpop.f32.mrf.mxu0
    %v1242 = vadd.f32 0.0, %v1241
    %v1243 = vpop.f32.mrf.mxu0
    %v1244 = vpop.f32.mrf.mxu0
    %v1245 = vpop.f32.mrf.mxu0
    %1246 = vdwg.mxu0
    %v1247 = vadd.f32 %v1206, %v1242
    %v1248 = vxor.u32 %v1247, 2147483648
    %v1249 = vmul.f32 %v1248, 1.442695
    %v1250 = vpow.pop %v1249
    %v1251 = vadd.f32 %v1250, 1.0
    %v1252 = vrcp.pop %v1251
    %v1253 = vmul.f32 1.0, %v1252
    %v1254 = vtanh.pop %v1247
    %v1255 = vmul.f32 %v1253, %v1145
    %1257 = vrot.lane.b32.xlu0 %v1254, 64
    %v1258 = vpop.permute.xlu0 %1257
    %v1260 = vmul.f32 %v1253, %v1258
    %1262 = vrot.lane.b32.xlu0 %v1260, 32
    %v1263 = vpop.permute.xlu0 %1262
    %v1265 = vadd.f32 %v1255, %v1263
    %v1266 = vtanh.pop %v1265
    %1268 = vrot.lane.b32.xlu0 %v1266, 64
    %v1269 = vpop.permute.xlu0 %1268
    %v1271 = vmul.f32 %v1253, %v1269
    %v1272 = vpack.c.bf16 %v1271, %v1271
    %1274 = vrot.lane.b32.xlu0 %v1272, 32
    %v1275 = vpop.permute.xlu0 %1274
    %v1277 = vsel %vm94, %v1275, 0
    %1279 = vmatprep.subr.bf16.mxu0 0
    %1280 = vmatpush1.bf16.msra.mxu0 0
    %1281 = vmatprep.subr.bf16.mxu0 0
    %1282 = vmatpush1.bf16.msra.mxu0 0
    %1283 = vmatprep.subr.bf16.mxu0 0
    %1284 = vmatpush1.bf16.msra.mxu0 0
    %1285 = vmatprep.subr.bf16.mxu0 0
    %1286 = vmatpush1.bf16.msra.mxu0 0
    %1287 = vmatprep.subr.bf16.mxu0 0
    %1288 = vmatpush1.bf16.msra.mxu0 0
    %1289 = vmatprep.subr.bf16.mxu0 0
    %1290 = vmatpush1.bf16.msra.mxu0 0
    %1291 = vmatprep.subr.bf16.mxu0 %v311
    %1292 = vmatpush1.bf16.msra.mxu0 %v310
    %1293 = vmatprep.subr.bf16.mxu0 %v309
    %1294 = vmatpush1.bf16.msra.mxu0 %v308
    %1295 = vmatprep.subr.bf16.mxu0 0
    %1296 = vmatpush2.bf16.msra.mxu0 0
    %1297 = vmatprep.subr.bf16.mxu0 0
    %1298 = vmatpush2.bf16.msra.mxu0 0
    %1299 = vmatprep.subr.bf16.mxu0 0
    %1300 = vmatpush2.bf16.msra.mxu0 0
    %1301 = vmatprep.subr.bf16.mxu0 0
    %1302 = vmatpush2.bf16.msra.mxu0 0
    %1303 = vmatprep.subr.bf16.mxu0 0
    %1304 = vmatpush2.bf16.msra.mxu0 0
    %1305 = vmatprep.subr.bf16.mxu0 0
    %1306 = vmatpush2.bf16.msra.mxu0 0
    %1307 = vmatprep.subr.bf16.mxu0 0
    %1308 = vmatpush2.bf16.msra.mxu0 0
    %1309 = vmatprep.subr.bf16.mxu0 0
    %1310 = vmatpush2.bf16.msra.mxu0 0
    %1311 = vmatprep.mubr.bf16.mxu0 0
    %1312 = vmatmul.mubr.bf16.gmra.mxu0 %v1277
    %v1313 = vpop.f32.mrf.mxu0
    %v1314 = vadd.f32 %v286, %v1313
    %v1315 = vpop.f32.mrf.mxu0
    %v1316 = vadd.f32 %v290, %v1315
    %v1317 = vpop.f32.mrf.mxu0
    %v1318 = vpop.f32.mrf.mxu0
    %1319 = vdwg.mxu0
    %s1320 = smul.u32 8, 2
    %s1321 = smul.addr %s1320, 8
    %s1322 = scalar_lea.vmem [#allocation6], %s1321
    %1323 = vst [vmem:[%s1322] sm:$0xff] %v1314
    %1324 = vst [vmem:[%s1322 + $0x8] sm:$0xff] %v1316
    // Predicated region
    $region30: #{tpu_custom_call.1} parent=1 // pred_check
      _
    $region31: #{tpu_custom_call.1} parent=1 // pred_check_branch
      %1326 = sbr.rel (0) target = $region33
    $region32: #{tpu_custom_call.1} parent=1 // pred_region
      %s1328 = ssub.s32 2304, 2304
      %1329 = vsyncadd [#allocation5], %s1328
      %s1330 = sshll.u32 [#allocation6], 4
      %s1331 = int_to_ptr.vmem [resolvable:$true] %s1330
      %1336 = dma.vmem_to_hbm [thread:$0]  %s1331, 2304, %s6, [#allocation5], 256, 256, 16
    $region33: #{tpu_custom_call.1} parent=1 // pred_fallthru
      _
    // Predicated region
    $region34: #{tpu_custom_call.1} parent=1 // pred_check
      _
    $region35: #{tpu_custom_call.1} parent=1 // pred_check_branch
      %1338 = sbr.rel (0) target = $region37
    $region36: #{tpu_custom_call.1} parent=1 // pred_region
      %1339 = dma.done [#allocation5], 2304
    $region37: #{tpu_custom_call.1} parent=1 // pred_fallthru
      _
    %1340 = vsyncpa [#allocation4], 1
    %1341 = vsyncpa [#allocation5], 1

</llo_original>
